<compile_context>
chip_gen: v7x
topology: tpu7x:2x2x1
jax: 0.10.0
libtpu: 0.0.40
codegen_flags: <defaults>
</compile_context>

<pallas_src>
import jax
import jax.numpy as jnp
from jax import lax
from jax.experimental import pallas as pl
from jax.experimental.pallas import tpu as pltpu


# ----------------------------------------------------------------------------
# Fused Pallas kernel: all GRU layers, full sequence, one launch.
# ----------------------------------------------------------------------------
def fused_gru_kernel(x_ref, h0_ref, wi_ref, wh_ref, bi_ref, bh_ref,
                     y_ref, hf_ref):
    # x_ref  : (T*B, H)    time-major input, flattened to 2-D (row = t*B + b)
    # h0_ref : (L, B, H)   initial hidden state per layer
    # wi_ref : (L, H, 3H)  input weights, gate cols r|z|n, pre-transposed
    # wh_ref : (L, H, 3H)  recurrent weights, gate cols r|z|n, pre-transposed
    # bi_ref : (L, 1, 3H)  [b_ih_r+b_hh_r | b_ih_z+b_hh_z | b_ih_n]
    # bh_ref : (L, 1, 3H)  [0 | 0 | b_hh_n]
    # y_ref  : (T*B, H)    per-step outputs of the LAST layer
    # hf_ref : (L, B, H)   final hidden state per layer (aliased with h0)
    TB, H = x_ref.shape
    L, B, _ = h0_ref.shape
    T = TB // B
    H2 = 2 * H

    x_all = x_ref[...]                       # (T*B, H), stays a value
    for l in range(L):                       # static unroll over layers
        # Hoisted, fused input-side gate matmul for the whole sequence
        # (off the serial recurrent critical path). r/z biases folded in.
        gi = jnp.dot(x_all, wi_ref[l],
                     preferred_element_type=jnp.float32) + bi_ref[l]

        wh = wh_ref[l]                       # (H, 3H) fused recurrent weight
        bh = bh_ref[l]                       # (1, 3H) = [0 | 0 | b_hh_n]

        h = h0_ref[l]                        # (B, H), carried in registers
        ys = []
        for t in range(T):                   # static unroll: T small & fixed
            # Single fused recurrent matmul per step (1 MXU round-trip).
            gh = jnp.dot(h, wh, preferred_element_type=jnp.float32) + bh
            gi_t = gi[t * B:(t + 1) * B]     # (B, 3H)

            # PyTorch GRU gate math (r, z, n). One sigmoid over r|z (2H
            # lanes) + one tanh => 2 EUP pushes per step.
            rz = jax.nn.sigmoid(gi_t[:, :H2] + gh[:, :H2])
            r = rz[:, :H]
            z = rz[:, H:]
            n = jnp.tanh(gi_t[:, H2:] + r * gh[:, H2:])
            h = (1.0 - z) * n + z * h
            ys.append(h)

        hf_ref[l] = h
        # Next layer consumes the stacked outputs as a VALUE (no VMEM
        # store/reload round-trip between layers).
        x_all = jnp.concatenate(ys, axis=0)  # (T*B, H)

    y_ref[...] = x_all                       # single full-block lane-dense store


def fused_gru_forward(kparams, x_tbh, h0):
    """x_tbh: (T, B, H) time-major; h0: (L, B, H). Returns (y_tbh, h_final)."""
    T, B, H = x_tbh.shape
    L = h0.shape[0]
    x2d = x_tbh.reshape(T * B, H)

    vmem = pl.BlockSpec(memory_space=pltpu.MemorySpace.VMEM)
    y2d, hf = pl.pallas_call(
        fused_gru_kernel,
        out_shape=(
            jax.ShapeDtypeStruct((T * B, H), jnp.float32),
            jax.ShapeDtypeStruct((L, B, H), jnp.float32),
        ),
        in_specs=[vmem] * 6,
        out_specs=(vmem, vmem),
        input_output_aliases={1: 1},         # h0 buffer reused for hf output
    )(x2d, h0, kparams["wi"], kparams["wh"], kparams["bi"], kparams["bh"])

    return y2d.reshape(T, B, H), hf


# ----------------------------------------------------------------------------
# Generator module in JAX (parameters + forward + init_hidden).
# ----------------------------------------------------------------------------
def init_generator_params(key, noise_dim, embed_dim, num_layers):
    """PyTorch-layout parameters (as nn.GRU / nn.Linear would store them)."""
    params = {}
    k = 1.0 / jnp.sqrt(embed_dim)
    keys = jax.random.split(key, 2 + 4 * num_layers)

    # noise2hidden: Linear(noise_dim, num_layers * embed_dim)
    kw = 1.0 / jnp.sqrt(noise_dim)
    params["n2h_w"] = jax.random.uniform(
        keys[0], (num_layers * embed_dim, noise_dim), jnp.float32, -kw, kw)
    params["n2h_b"] = jax.random.uniform(
        keys[1], (num_layers * embed_dim,), jnp.float32, -kw, kw)

    # GRU layers (input_size == hidden_size == embed_dim for every layer)
    for l in range(num_layers):
        ks = keys[2 + 4 * l: 2 + 4 * (l + 1)]
        params[f"w_ih_l{l}"] = jax.random.uniform(
            ks[0], (3 * embed_dim, embed_dim), jnp.float32, -k, k)
        params[f"w_hh_l{l}"] = jax.random.uniform(
            ks[1], (3 * embed_dim, embed_dim), jnp.float32, -k, k)
        params[f"b_ih_l{l}"] = jax.random.uniform(
            ks[2], (3 * embed_dim,), jnp.float32, -k, k)
        params[f"b_hh_l{l}"] = jax.random.uniform(
            ks[3], (3 * embed_dim,), jnp.float32, -k, k)
    return params


def prepare_kernel_params(params, num_layers, embed_dim):
    """One-time prep: transpose, concat gates r|z|n, fold biases, stack layers."""
    H = embed_dim
    wi, wh, bi, bh = [], [], [], []
    for l in range(num_layers):
        w_ih = params[f"w_ih_l{l}"]          # (3H, H), rows: r | z | n
        w_hh = params[f"w_hh_l{l}"]          # (3H, H)
        b_ih = params[f"b_ih_l{l}"]          # (3H,)
        b_hh = params[f"b_hh_l{l}"]          # (3H,)

        wi.append(jnp.transpose(w_ih))       # (H, 3H), cols grouped r|z|n
        wh.append(jnp.transpose(w_hh))       # (H, 3H)

        # Fold b_ih+b_hh for r/z; keep b_ih_n on the input side and b_hh_n on
        # the hidden side (r multiplies gh_n + b_hh_n in PyTorch GRU).
        bi.append(jnp.concatenate([
            b_ih[0:H] + b_hh[0:H],
            b_ih[H:2 * H] + b_hh[H:2 * H],
            b_ih[2 * H:3 * H],
        ]).reshape(1, 3 * H))
        bh.append(jnp.concatenate([
            jnp.zeros((2 * H,), jnp.float32),
            b_hh[2 * H:3 * H],
        ]).reshape(1, 3 * H))

    stack = lambda xs: jnp.stack(xs, axis=0)
    return {"wi": stack(wi), "wh": stack(wh), "bi": stack(bi), "bh": stack(bh)}


def generator_init_hidden(params, noise, num_layers, embed_dim):
    # tanh(Linear(noise)).view(num_layers, 1, embed_dim)  -- plain JAX glue.
    h = jnp.tanh(params["n2h_w"] @ noise + params["n2h_b"])
    return h.reshape(num_layers, 1, embed_dim)


@jax.jit
def generator_forward(kparams, o, h):
    """o: (B, T, H) batch_first, h: (L, B, H).  Returns (o_out, h_out)."""
    x = jnp.transpose(o, (1, 0, 2))          # -> time-major (T, B, H)
    y_tbh, h_out = fused_gru_forward(kparams, x, h)
    o_out = jnp.transpose(y_tbh, (1, 0, 2))  # back to batch_first
    return o_out, h_out


# ----------------------------------------------------------------------------
# Pure-JAX reference (for correctness check against the Pallas kernel).
# ----------------------------------------------------------------------------
def ref_gru_layer(x_tbh, h0, w_ih, w_hh, b_ih, b_hh):
    def step(h, x_t):
        gi = x_t @ w_ih.T + b_ih
        gh = h @ w_hh.T + b_hh
        i_r, i_z, i_n = jnp.split(gi, 3, axis=-1)
        h_r, h_z, h_n = jnp.split(gh, 3, axis=-1)
        r = jax.nn.sigmoid(i_r + h_r)
        z = jax.nn.sigmoid(i_z + h_z)
        n = jnp.tanh(i_n + r * h_n)
        h_new = (1.0 - z) * n + z * h
        return h_new, h_new
    hf, ys = lax.scan(step, h0, x_tbh)
    return ys, hf


def ref_forward(params, o, h, num_layers):
    x = jnp.transpose(o, (1, 0, 2))
    h_finals = []
    for l in range(num_layers):
        x, hf = ref_gru_layer(
            x, h[l],
            params[f"w_ih_l{l}"], params[f"w_hh_l{l}"],
            params[f"b_ih_l{l}"], params[f"b_hh_l{l}"],
        )
        h_finals.append(hf)
    return jnp.transpose(x, (1, 0, 2)), jnp.stack(h_finals, axis=0)


if __name__ == "__main__":
    noise_dim = 16
    embed_dim = 32
    num_layers = 2
    batch = 1        # init_hidden produces a batch-1 hidden state
    seq = 8

    key = jax.random.PRNGKey(0)
    kp, kn, ko = jax.random.split(key, 3)

    params = init_generator_params(kp, noise_dim, embed_dim, num_layers)
    kparams = prepare_kernel_params(params, num_layers, embed_dim)  # one-time prep

    noise = jax.random.normal(kn, (noise_dim,), jnp.float32)
    h0 = generator_init_hidden(params, noise, num_layers, embed_dim)    # (L, 1, H)
    o_in = jax.random.normal(ko, (batch, seq, embed_dim), jnp.float32)  # (B, T, H)

    o_out, h_out = generator_forward(kparams, o_in, h0)
    o_out = jax.block_until_ready(o_out)
    h_out = jax.block_until_ready(h_out)

    assert o_out.shape == (batch, seq, embed_dim)
    assert h_out.shape == (num_layers, batch, embed_dim)

    o_ref, h_ref = ref_forward(params, o_in, h0, num_layers)
    assert jnp.allclose(o_out, o_ref, atol=1e-5, rtol=1e-5)
    assert jnp.allclose(h_out, h_ref, atol=1e-5, rtol=1e-5)

    print("KERNEL_OK")
</pallas_src>

<mosaic_0001>
module attributes {stable_mosaic.version = 11 : i64} {
  func.func @fused_gru_kernel(%arg0: memref<8x32xf32, #tpu.memory_space<vmem>>, %arg1: memref<2x1x32xf32, #tpu.memory_space<vmem>>, %arg2: memref<2x32x96xf32, #tpu.memory_space<vmem>>, %arg3: memref<2x32x96xf32, #tpu.memory_space<vmem>>, %arg4: memref<2x1x96xf32, #tpu.memory_space<vmem>>, %arg5: memref<2x1x96xf32, #tpu.memory_space<vmem>>, %arg6: memref<8x32xf32, #tpu.memory_space<vmem>>, %arg7: memref<2x1x32xf32, #tpu.memory_space<vmem>>) attributes {dimension_semantics = [], scalar_prefetch = 0 : i64, scratch_operands = 0 : i64, tpu.core_type = #tpu.core_type<tc>} {
    %c0 = arith.constant 0 : index
    %c0_0 = arith.constant 0 : index
    %0 = vector.load %arg0[%c0, %c0_0] : memref<8x32xf32, #tpu.memory_space<vmem>>, vector<8x32xf32>
    %c0_1 = arith.constant 0 : index
    %c0_2 = arith.constant 0 : index
    %c0_3 = arith.constant 0 : index
    %1 = vector.load %arg2[%c0_1, %c0_2, %c0_3] : memref<2x32x96xf32, #tpu.memory_space<vmem>>, vector<1x32x96xf32>
    %2 = vector.shape_cast %1 : vector<1x32x96xf32> to vector<32x96xf32>
    %cst = arith.constant dense<0.000000e+00> : vector<8x96xf32>
    %3 = tpu.matmul %0, %2, %cst {dimension_numbers = #tpu.dot_dimension_numbers<[1], [0], [0], [1], [0, 0, 1, 1], [], []>} : vector<8x32xf32>, vector<32x96xf32>, vector<8x96xf32> -> vector<8x96xf32>
    %c0_4 = arith.constant 0 : index
    %c0_5 = arith.constant 0 : index
    %c0_6 = arith.constant 0 : index
    %4 = vector.load %arg4[%c0_4, %c0_5, %c0_6] : memref<2x1x96xf32, #tpu.memory_space<vmem>>, vector<1x1x96xf32>
    %5 = vector.shape_cast %4 : vector<1x1x96xf32> to vector<1x96xf32>
    %6 = vector.broadcast %5 : vector<1x96xf32> to vector<8x96xf32>
    %7 = arith.addf %3, %6 : vector<8x96xf32>
    %c0_7 = arith.constant 0 : index
    %c0_8 = arith.constant 0 : index
    %c0_9 = arith.constant 0 : index
    %8 = vector.load %arg3[%c0_7, %c0_8, %c0_9] : memref<2x32x96xf32, #tpu.memory_space<vmem>>, vector<1x32x96xf32>
    %9 = vector.shape_cast %8 : vector<1x32x96xf32> to vector<32x96xf32>
    %c0_10 = arith.constant 0 : index
    %c0_11 = arith.constant 0 : index
    %c0_12 = arith.constant 0 : index
    %10 = vector.load %arg5[%c0_10, %c0_11, %c0_12] : memref<2x1x96xf32, #tpu.memory_space<vmem>>, vector<1x1x96xf32>
    %11 = vector.shape_cast %10 : vector<1x1x96xf32> to vector<1x96xf32>
    %c0_13 = arith.constant 0 : index
    %c0_14 = arith.constant 0 : index
    %c0_15 = arith.constant 0 : index
    %12 = vector.load %arg1[%c0_13, %c0_14, %c0_15] : memref<2x1x32xf32, #tpu.memory_space<vmem>>, vector<1x1x32xf32>
    %13 = vector.shape_cast %12 : vector<1x1x32xf32> to vector<1x32xf32>
    %cst_16 = arith.constant dense<0.000000e+00> : vector<1x96xf32>
    %14 = tpu.matmul %13, %9, %cst_16 {dimension_numbers = #tpu.dot_dimension_numbers<[1], [0], [0], [1], [0, 0, 1, 1], [], []>} : vector<1x32xf32>, vector<32x96xf32>, vector<1x96xf32> -> vector<1x96xf32>
    %15 = arith.addf %14, %11 : vector<1x96xf32>
    %16 = vector.extract_strided_slice %7 {offsets = [0, 0], sizes = [1, 96], strides = [1, 1]} : vector<8x96xf32> to vector<1x96xf32>
    %17 = vector.extract_strided_slice %16 {offsets = [0, 0], sizes = [1, 64], strides = [1, 1]} : vector<1x96xf32> to vector<1x64xf32>
    %18 = vector.extract_strided_slice %15 {offsets = [0, 0], sizes = [1, 64], strides = [1, 1]} : vector<1x96xf32> to vector<1x64xf32>
    %19 = arith.addf %17, %18 : vector<1x64xf32>
    %20 = arith.negf %19 : vector<1x64xf32>
    %21 = math.exp %20 : vector<1x64xf32>
    %cst_17 = arith.constant 1.000000e+00 : f32
    %22 = vector.broadcast %cst_17 : f32 to vector<1x64xf32>
    %23 = arith.addf %22, %21 : vector<1x64xf32>
    %24 = arith.divf %22, %23 : vector<1x64xf32>
    %25 = vector.extract_strided_slice %24 {offsets = [0, 0], sizes = [1, 32], strides = [1, 1]} : vector<1x64xf32> to vector<1x32xf32>
    %26 = vector.extract_strided_slice %24 {offsets = [0, 32], sizes = [1, 32], strides = [1, 1]} : vector<1x64xf32> to vector<1x32xf32>
    %27 = vector.extract_strided_slice %16 {offsets = [0, 64], sizes = [1, 32], strides = [1, 1]} : vector<1x96xf32> to vector<1x32xf32>
    %28 = vector.extract_strided_slice %15 {offsets = [0, 64], sizes = [1, 32], strides = [1, 1]} : vector<1x96xf32> to vector<1x32xf32>
    %29 = arith.mulf %25, %28 : vector<1x32xf32>
    %30 = arith.addf %27, %29 : vector<1x32xf32>
    %31 = math.tanh %30 : vector<1x32xf32>
    %cst_18 = arith.constant 1.000000e+00 : f32
    %32 = vector.broadcast %cst_18 : f32 to vector<1x32xf32>
    %33 = arith.subf %32, %26 : vector<1x32xf32>
    %34 = arith.mulf %33, %31 : vector<1x32xf32>
    %35 = arith.mulf %26, %13 : vector<1x32xf32>
    %36 = arith.addf %34, %35 : vector<1x32xf32>
    %cst_19 = arith.constant dense<0.000000e+00> : vector<1x96xf32>
    %37 = tpu.matmul %36, %9, %cst_19 {dimension_numbers = #tpu.dot_dimension_numbers<[1], [0], [0], [1], [0, 0, 1, 1], [], []>} : vector<1x32xf32>, vector<32x96xf32>, vector<1x96xf32> -> vector<1x96xf32>
    %38 = arith.addf %37, %11 : vector<1x96xf32>
    %39 = vector.extract_strided_slice %7 {offsets = [1, 0], sizes = [1, 96], strides = [1, 1]} : vector<8x96xf32> to vector<1x96xf32>
    %40 = vector.extract_strided_slice %39 {offsets = [0, 0], sizes = [1, 64], strides = [1, 1]} : vector<1x96xf32> to vector<1x64xf32>
    %41 = vector.extract_strided_slice %38 {offsets = [0, 0], sizes = [1, 64], strides = [1, 1]} : vector<1x96xf32> to vector<1x64xf32>
    %42 = arith.addf %40, %41 : vector<1x64xf32>
    %43 = arith.negf %42 : vector<1x64xf32>
    %44 = math.exp %43 : vector<1x64xf32>
    %cst_20 = arith.constant 1.000000e+00 : f32
    %45 = vector.broadcast %cst_20 : f32 to vector<1x64xf32>
    %46 = arith.addf %45, %44 : vector<1x64xf32>
    %47 = arith.divf %45, %46 : vector<1x64xf32>
    %48 = vector.extract_strided_slice %47 {offsets = [0, 0], sizes = [1, 32], strides = [1, 1]} : vector<1x64xf32> to vector<1x32xf32>
    %49 = vector.extract_strided_slice %47 {offsets = [0, 32], sizes = [1, 32], strides = [1, 1]} : vector<1x64xf32> to vector<1x32xf32>
    %50 = vector.extract_strided_slice %39 {offsets = [0, 64], sizes = [1, 32], strides = [1, 1]} : vector<1x96xf32> to vector<1x32xf32>
    %51 = vector.extract_strided_slice %38 {offsets = [0, 64], sizes = [1, 32], strides = [1, 1]} : vector<1x96xf32> to vector<1x32xf32>
    %52 = arith.mulf %48, %51 : vector<1x32xf32>
    %53 = arith.addf %50, %52 : vector<1x32xf32>
    %54 = math.tanh %53 : vector<1x32xf32>
    %cst_21 = arith.constant 1.000000e+00 : f32
    %55 = vector.broadcast %cst_21 : f32 to vector<1x32xf32>
    %56 = arith.subf %55, %49 : vector<1x32xf32>
    %57 = arith.mulf %56, %54 : vector<1x32xf32>
    %58 = arith.mulf %49, %36 : vector<1x32xf32>
    %59 = arith.addf %57, %58 : vector<1x32xf32>
    %cst_22 = arith.constant dense<0.000000e+00> : vector<1x96xf32>
    %60 = tpu.matmul %59, %9, %cst_22 {dimension_numbers = #tpu.dot_dimension_numbers<[1], [0], [0], [1], [0, 0, 1, 1], [], []>} : vector<1x32xf32>, vector<32x96xf32>, vector<1x96xf32> -> vector<1x96xf32>
    %61 = arith.addf %60, %11 : vector<1x96xf32>
    %62 = vector.extract_strided_slice %7 {offsets = [2, 0], sizes = [1, 96], strides = [1, 1]} : vector<8x96xf32> to vector<1x96xf32>
    %63 = vector.extract_strided_slice %62 {offsets = [0, 0], sizes = [1, 64], strides = [1, 1]} : vector<1x96xf32> to vector<1x64xf32>
    %64 = vector.extract_strided_slice %61 {offsets = [0, 0], sizes = [1, 64], strides = [1, 1]} : vector<1x96xf32> to vector<1x64xf32>
    %65 = arith.addf %63, %64 : vector<1x64xf32>
    %66 = arith.negf %65 : vector<1x64xf32>
    %67 = math.exp %66 : vector<1x64xf32>
    %cst_23 = arith.constant 1.000000e+00 : f32
    %68 = vector.broadcast %cst_23 : f32 to vector<1x64xf32>
    %69 = arith.addf %68, %67 : vector<1x64xf32>
    %70 = arith.divf %68, %69 : vector<1x64xf32>
    %71 = vector.extract_strided_slice %70 {offsets = [0, 0], sizes = [1, 32], strides = [1, 1]} : vector<1x64xf32> to vector<1x32xf32>
    %72 = vector.extract_strided_slice %70 {offsets = [0, 32], sizes = [1, 32], strides = [1, 1]} : vector<1x64xf32> to vector<1x32xf32>
    %73 = vector.extract_strided_slice %62 {offsets = [0, 64], sizes = [1, 32], strides = [1, 1]} : vector<1x96xf32> to vector<1x32xf32>
    %74 = vector.extract_strided_slice %61 {offsets = [0, 64], sizes = [1, 32], strides = [1, 1]} : vector<1x96xf32> to vector<1x32xf32>
    %75 = arith.mulf %71, %74 : vector<1x32xf32>
    %76 = arith.addf %73, %75 : vector<1x32xf32>
    %77 = math.tanh %76 : vector<1x32xf32>
    %cst_24 = arith.constant 1.000000e+00 : f32
    %78 = vector.broadcast %cst_24 : f32 to vector<1x32xf32>
    %79 = arith.subf %78, %72 : vector<1x32xf32>
    %80 = arith.mulf %79, %77 : vector<1x32xf32>
    %81 = arith.mulf %72, %59 : vector<1x32xf32>
    %82 = arith.addf %80, %81 : vector<1x32xf32>
    %cst_25 = arith.constant dense<0.000000e+00> : vector<1x96xf32>
    %83 = tpu.matmul %82, %9, %cst_25 {dimension_numbers = #tpu.dot_dimension_numbers<[1], [0], [0], [1], [0, 0, 1, 1], [], []>} : vector<1x32xf32>, vector<32x96xf32>, vector<1x96xf32> -> vector<1x96xf32>
    %84 = arith.addf %83, %11 : vector<1x96xf32>
    %85 = vector.extract_strided_slice %7 {offsets = [3, 0], sizes = [1, 96], strides = [1, 1]} : vector<8x96xf32> to vector<1x96xf32>
    %86 = vector.extract_strided_slice %85 {offsets = [0, 0], sizes = [1, 64], strides = [1, 1]} : vector<1x96xf32> to vector<1x64xf32>
    %87 = vector.extract_strided_slice %84 {offsets = [0, 0], sizes = [1, 64], strides = [1, 1]} : vector<1x96xf32> to vector<1x64xf32>
    %88 = arith.addf %86, %87 : vector<1x64xf32>
    %89 = arith.negf %88 : vector<1x64xf32>
    %90 = math.exp %89 : vector<1x64xf32>
    %cst_26 = arith.constant 1.000000e+00 : f32
    %91 = vector.broadcast %cst_26 : f32 to vector<1x64xf32>
    %92 = arith.addf %91, %90 : vector<1x64xf32>
    %93 = arith.divf %91, %92 : vector<1x64xf32>
    %94 = vector.extract_strided_slice %93 {offsets = [0, 0], sizes = [1, 32], strides = [1, 1]} : vector<1x64xf32> to vector<1x32xf32>
    %95 = vector.extract_strided_slice %93 {offsets = [0, 32], sizes = [1, 32], strides = [1, 1]} : vector<1x64xf32> to vector<1x32xf32>
    %96 = vector.extract_strided_slice %85 {offsets = [0, 64], sizes = [1, 32], strides = [1, 1]} : vector<1x96xf32> to vector<1x32xf32>
    %97 = vector.extract_strided_slice %84 {offsets = [0, 64], sizes = [1, 32], strides = [1, 1]} : vector<1x96xf32> to vector<1x32xf32>
    %98 = arith.mulf %94, %97 : vector<1x32xf32>
    %99 = arith.addf %96, %98 : vector<1x32xf32>
    %100 = math.tanh %99 : vector<1x32xf32>
    %cst_27 = arith.constant 1.000000e+00 : f32
    %101 = vector.broadcast %cst_27 : f32 to vector<1x32xf32>
    %102 = arith.subf %101, %95 : vector<1x32xf32>
    %103 = arith.mulf %102, %100 : vector<1x32xf32>
    %104 = arith.mulf %95, %82 : vector<1x32xf32>
    %105 = arith.addf %103, %104 : vector<1x32xf32>
    %cst_28 = arith.constant dense<0.000000e+00> : vector<1x96xf32>
    %106 = tpu.matmul %105, %9, %cst_28 {dimension_numbers = #tpu.dot_dimension_numbers<[1], [0], [0], [1], [0, 0, 1, 1], [], []>} : vector<1x32xf32>, vector<32x96xf32>, vector<1x96xf32> -> vector<1x96xf32>
    %107 = arith.addf %106, %11 : vector<1x96xf32>
    %108 = vector.extract_strided_slice %7 {offsets = [4, 0], sizes = [1, 96], strides = [1, 1]} : vector<8x96xf32> to vector<1x96xf32>
    %109 = vector.extract_strided_slice %108 {offsets = [0, 0], sizes = [1, 64], strides = [1, 1]} : vector<1x96xf32> to vector<1x64xf32>
    %110 = vector.extract_strided_slice %107 {offsets = [0, 0], sizes = [1, 64], strides = [1, 1]} : vector<1x96xf32> to vector<1x64xf32>
    %111 = arith.addf %109, %110 : vector<1x64xf32>
    %112 = arith.negf %111 : vector<1x64xf32>
    %113 = math.exp %112 : vector<1x64xf32>
    %cst_29 = arith.constant 1.000000e+00 : f32
    %114 = vector.broadcast %cst_29 : f32 to vector<1x64xf32>
    %115 = arith.addf %114, %113 : vector<1x64xf32>
    %116 = arith.divf %114, %115 : vector<1x64xf32>
    %117 = vector.extract_strided_slice %116 {offsets = [0, 0], sizes = [1, 32], strides = [1, 1]} : vector<1x64xf32> to vector<1x32xf32>
    %118 = vector.extract_strided_slice %116 {offsets = [0, 32], sizes = [1, 32], strides = [1, 1]} : vector<1x64xf32> to vector<1x32xf32>
    %119 = vector.extract_strided_slice %108 {offsets = [0, 64], sizes = [1, 32], strides = [1, 1]} : vector<1x96xf32> to vector<1x32xf32>
    %120 = vector.extract_strided_slice %107 {offsets = [0, 64], sizes = [1, 32], strides = [1, 1]} : vector<1x96xf32> to vector<1x32xf32>
    %121 = arith.mulf %117, %120 : vector<1x32xf32>
    %122 = arith.addf %119, %121 : vector<1x32xf32>
    %123 = math.tanh %122 : vector<1x32xf32>
    %cst_30 = arith.constant 1.000000e+00 : f32
    %124 = vector.broadcast %cst_30 : f32 to vector<1x32xf32>
    %125 = arith.subf %124, %118 : vector<1x32xf32>
    %126 = arith.mulf %125, %123 : vector<1x32xf32>
    %127 = arith.mulf %118, %105 : vector<1x32xf32>
    %128 = arith.addf %126, %127 : vector<1x32xf32>
    %cst_31 = arith.constant dense<0.000000e+00> : vector<1x96xf32>
    %129 = tpu.matmul %128, %9, %cst_31 {dimension_numbers = #tpu.dot_dimension_numbers<[1], [0], [0], [1], [0, 0, 1, 1], [], []>} : vector<1x32xf32>, vector<32x96xf32>, vector<1x96xf32> -> vector<1x96xf32>
    %130 = arith.addf %129, %11 : vector<1x96xf32>
    %131 = vector.extract_strided_slice %7 {offsets = [5, 0], sizes = [1, 96], strides = [1, 1]} : vector<8x96xf32> to vector<1x96xf32>
    %132 = vector.extract_strided_slice %131 {offsets = [0, 0], sizes = [1, 64], strides = [1, 1]} : vector<1x96xf32> to vector<1x64xf32>
    %133 = vector.extract_strided_slice %130 {offsets = [0, 0], sizes = [1, 64], strides = [1, 1]} : vector<1x96xf32> to vector<1x64xf32>
    %134 = arith.addf %132, %133 : vector<1x64xf32>
    %135 = arith.negf %134 : vector<1x64xf32>
    %136 = math.exp %135 : vector<1x64xf32>
    %cst_32 = arith.constant 1.000000e+00 : f32
    %137 = vector.broadcast %cst_32 : f32 to vector<1x64xf32>
    %138 = arith.addf %137, %136 : vector<1x64xf32>
    %139 = arith.divf %137, %138 : vector<1x64xf32>
    %140 = vector.extract_strided_slice %139 {offsets = [0, 0], sizes = [1, 32], strides = [1, 1]} : vector<1x64xf32> to vector<1x32xf32>
    %141 = vector.extract_strided_slice %139 {offsets = [0, 32], sizes = [1, 32], strides = [1, 1]} : vector<1x64xf32> to vector<1x32xf32>
    %142 = vector.extract_strided_slice %131 {offsets = [0, 64], sizes = [1, 32], strides = [1, 1]} : vector<1x96xf32> to vector<1x32xf32>
    %143 = vector.extract_strided_slice %130 {offsets = [0, 64], sizes = [1, 32], strides = [1, 1]} : vector<1x96xf32> to vector<1x32xf32>
    %144 = arith.mulf %140, %143 : vector<1x32xf32>
    %145 = arith.addf %142, %144 : vector<1x32xf32>
    %146 = math.tanh %145 : vector<1x32xf32>
    %cst_33 = arith.constant 1.000000e+00 : f32
    %147 = vector.broadcast %cst_33 : f32 to vector<1x32xf32>
    %148 = arith.subf %147, %141 : vector<1x32xf32>
    %149 = arith.mulf %148, %146 : vector<1x32xf32>
    %150 = arith.mulf %141, %128 : vector<1x32xf32>
    %151 = arith.addf %149, %150 : vector<1x32xf32>
    %cst_34 = arith.constant dense<0.000000e+00> : vector<1x96xf32>
    %152 = tpu.matmul %151, %9, %cst_34 {dimension_numbers = #tpu.dot_dimension_numbers<[1], [0], [0], [1], [0, 0, 1, 1], [], []>} : vector<1x32xf32>, vector<32x96xf32>, vector<1x96xf32> -> vector<1x96xf32>
    %153 = arith.addf %152, %11 : vector<1x96xf32>
    %154 = vector.extract_strided_slice %7 {offsets = [6, 0], sizes = [1, 96], strides = [1, 1]} : vector<8x96xf32> to vector<1x96xf32>
    %155 = vector.extract_strided_slice %154 {offsets = [0, 0], sizes = [1, 64], strides = [1, 1]} : vector<1x96xf32> to vector<1x64xf32>
    %156 = vector.extract_strided_slice %153 {offsets = [0, 0], sizes = [1, 64], strides = [1, 1]} : vector<1x96xf32> to vector<1x64xf32>
    %157 = arith.addf %155, %156 : vector<1x64xf32>
    %158 = arith.negf %157 : vector<1x64xf32>
    %159 = math.exp %158 : vector<1x64xf32>
    %cst_35 = arith.constant 1.000000e+00 : f32
    %160 = vector.broadcast %cst_35 : f32 to vector<1x64xf32>
    %161 = arith.addf %160, %159 : vector<1x64xf32>
    %162 = arith.divf %160, %161 : vector<1x64xf32>
    %163 = vector.extract_strided_slice %162 {offsets = [0, 0], sizes = [1, 32], strides = [1, 1]} : vector<1x64xf32> to vector<1x32xf32>
    %164 = vector.extract_strided_slice %162 {offsets = [0, 32], sizes = [1, 32], strides = [1, 1]} : vector<1x64xf32> to vector<1x32xf32>
    %165 = vector.extract_strided_slice %154 {offsets = [0, 64], sizes = [1, 32], strides = [1, 1]} : vector<1x96xf32> to vector<1x32xf32>
    %166 = vector.extract_strided_slice %153 {offsets = [0, 64], sizes = [1, 32], strides = [1, 1]} : vector<1x96xf32> to vector<1x32xf32>
    %167 = arith.mulf %163, %166 : vector<1x32xf32>
    %168 = arith.addf %165, %167 : vector<1x32xf32>
    %169 = math.tanh %168 : vector<1x32xf32>
    %cst_36 = arith.constant 1.000000e+00 : f32
    %170 = vector.broadcast %cst_36 : f32 to vector<1x32xf32>
    %171 = arith.subf %170, %164 : vector<1x32xf32>
    %172 = arith.mulf %171, %169 : vector<1x32xf32>
    %173 = arith.mulf %164, %151 : vector<1x32xf32>
    %174 = arith.addf %172, %173 : vector<1x32xf32>
    %cst_37 = arith.constant dense<0.000000e+00> : vector<1x96xf32>
    %175 = tpu.matmul %174, %9, %cst_37 {dimension_numbers = #tpu.dot_dimension_numbers<[1], [0], [0], [1], [0, 0, 1, 1], [], []>} : vector<1x32xf32>, vector<32x96xf32>, vector<1x96xf32> -> vector<1x96xf32>
    %176 = arith.addf %175, %11 : vector<1x96xf32>
    %177 = vector.extract_strided_slice %7 {offsets = [7, 0], sizes = [1, 96], strides = [1, 1]} : vector<8x96xf32> to vector<1x96xf32>
    %178 = vector.extract_strided_slice %177 {offsets = [0, 0], sizes = [1, 64], strides = [1, 1]} : vector<1x96xf32> to vector<1x64xf32>
    %179 = vector.extract_strided_slice %176 {offsets = [0, 0], sizes = [1, 64], strides = [1, 1]} : vector<1x96xf32> to vector<1x64xf32>
    %180 = arith.addf %178, %179 : vector<1x64xf32>
    %181 = arith.negf %180 : vector<1x64xf32>
    %182 = math.exp %181 : vector<1x64xf32>
    %cst_38 = arith.constant 1.000000e+00 : f32
    %183 = vector.broadcast %cst_38 : f32 to vector<1x64xf32>
    %184 = arith.addf %183, %182 : vector<1x64xf32>
    %185 = arith.divf %183, %184 : vector<1x64xf32>
    %186 = vector.extract_strided_slice %185 {offsets = [0, 0], sizes = [1, 32], strides = [1, 1]} : vector<1x64xf32> to vector<1x32xf32>
    %187 = vector.extract_strided_slice %185 {offsets = [0, 32], sizes = [1, 32], strides = [1, 1]} : vector<1x64xf32> to vector<1x32xf32>
    %188 = vector.extract_strided_slice %177 {offsets = [0, 64], sizes = [1, 32], strides = [1, 1]} : vector<1x96xf32> to vector<1x32xf32>
    %189 = vector.extract_strided_slice %176 {offsets = [0, 64], sizes = [1, 32], strides = [1, 1]} : vector<1x96xf32> to vector<1x32xf32>
    %190 = arith.mulf %186, %189 : vector<1x32xf32>
    %191 = arith.addf %188, %190 : vector<1x32xf32>
    %192 = math.tanh %191 : vector<1x32xf32>
    %cst_39 = arith.constant 1.000000e+00 : f32
    %193 = vector.broadcast %cst_39 : f32 to vector<1x32xf32>
    %194 = arith.subf %193, %187 : vector<1x32xf32>
    %195 = arith.mulf %194, %192 : vector<1x32xf32>
    %196 = arith.mulf %187, %174 : vector<1x32xf32>
    %197 = arith.addf %195, %196 : vector<1x32xf32>
    %c0_40 = arith.constant 0 : index
    %c0_41 = arith.constant 0 : index
    %c0_42 = arith.constant 0 : index
    %198 = vector.load %arg7[%c0_40, %c0_41, %c0_42] : memref<2x1x32xf32, #tpu.memory_space<vmem>>, vector<1x1x32xf32>
    %199 = vector.shape_cast %198 : vector<1x1x32xf32> to vector<1x32xf32>
    %200 = vector.shape_cast %197 : vector<1x32xf32> to vector<1x1x32xf32>
    tpu.vector_store %arg7[%c0_40, %c0_41, %c0_42], %200 {strides = array<i32>} : memref<2x1x32xf32, #tpu.memory_space<vmem>>, vector<1x1x32xf32>,
    %201 = tpu.concatenate %36, %59, %82, %105, %128, %151, %174, %197 in 0 : vector<1x32xf32>, vector<1x32xf32>, vector<1x32xf32>, vector<1x32xf32>, vector<1x32xf32>, vector<1x32xf32>, vector<1x32xf32>, vector<1x32xf32> -> vector<8x32xf32>
    %c1 = arith.constant 1 : index
    %c0_43 = arith.constant 0 : index
    %c0_44 = arith.constant 0 : index
    %202 = vector.load %arg2[%c1, %c0_43, %c0_44] : memref<2x32x96xf32, #tpu.memory_space<vmem>>, vector<1x32x96xf32>
    %203 = vector.shape_cast %202 : vector<1x32x96xf32> to vector<32x96xf32>
    %cst_45 = arith.constant dense<0.000000e+00> : vector<8x96xf32>
    %204 = tpu.matmul %201, %203, %cst_45 {dimension_numbers = #tpu.dot_dimension_numbers<[1], [0], [0], [1], [0, 0, 1, 1], [], []>} : vector<8x32xf32>, vector<32x96xf32>, vector<8x96xf32> -> vector<8x96xf32>
    %c1_46 = arith.constant 1 : index
    %c0_47 = arith.constant 0 : index
    %c0_48 = arith.constant 0 : index
    %205 = vector.load %arg4[%c1_46, %c0_47, %c0_48] : memref<2x1x96xf32, #tpu.memory_space<vmem>>, vector<1x1x96xf32>
    %206 = vector.shape_cast %205 : vector<1x1x96xf32> to vector<1x96xf32>
    %207 = vector.broadcast %206 : vector<1x96xf32> to vector<8x96xf32>
    %208 = arith.addf %204, %207 : vector<8x96xf32>
    %c1_49 = arith.constant 1 : index
    %c0_50 = arith.constant 0 : index
    %c0_51 = arith.constant 0 : index
    %209 = vector.load %arg3[%c1_49, %c0_50, %c0_51] : memref<2x32x96xf32, #tpu.memory_space<vmem>>, vector<1x32x96xf32>
    %210 = vector.shape_cast %209 : vector<1x32x96xf32> to vector<32x96xf32>
    %c1_52 = arith.constant 1 : index
    %c0_53 = arith.constant 0 : index
    %c0_54 = arith.constant 0 : index
    %211 = vector.load %arg5[%c1_52, %c0_53, %c0_54] : memref<2x1x96xf32, #tpu.memory_space<vmem>>, vector<1x1x96xf32>
    %212 = vector.shape_cast %211 : vector<1x1x96xf32> to vector<1x96xf32>
    %c1_55 = arith.constant 1 : index
    %c0_56 = arith.constant 0 : index
    %c0_57 = arith.constant 0 : index
    %213 = vector.load %arg1[%c1_55, %c0_56, %c0_57] : memref<2x1x32xf32, #tpu.memory_space<vmem>>, vector<1x1x32xf32>
    %214 = vector.shape_cast %213 : vector<1x1x32xf32> to vector<1x32xf32>
    %cst_58 = arith.constant dense<0.000000e+00> : vector<1x96xf32>
    %215 = tpu.matmul %214, %210, %cst_58 {dimension_numbers = #tpu.dot_dimension_numbers<[1], [0], [0], [1], [0, 0, 1, 1], [], []>} : vector<1x32xf32>, vector<32x96xf32>, vector<1x96xf32> -> vector<1x96xf32>
    %216 = arith.addf %215, %212 : vector<1x96xf32>
    %217 = vector.extract_strided_slice %208 {offsets = [0, 0], sizes = [1, 96], strides = [1, 1]} : vector<8x96xf32> to vector<1x96xf32>
    %218 = vector.extract_strided_slice %217 {offsets = [0, 0], sizes = [1, 64], strides = [1, 1]} : vector<1x96xf32> to vector<1x64xf32>
    %219 = vector.extract_strided_slice %216 {offsets = [0, 0], sizes = [1, 64], strides = [1, 1]} : vector<1x96xf32> to vector<1x64xf32>
    %220 = arith.addf %218, %219 : vector<1x64xf32>
    %221 = arith.negf %220 : vector<1x64xf32>
    %222 = math.exp %221 : vector<1x64xf32>
    %cst_59 = arith.constant 1.000000e+00 : f32
    %223 = vector.broadcast %cst_59 : f32 to vector<1x64xf32>
    %224 = arith.addf %223, %222 : vector<1x64xf32>
    %225 = arith.divf %223, %224 : vector<1x64xf32>
    %226 = vector.extract_strided_slice %225 {offsets = [0, 0], sizes = [1, 32], strides = [1, 1]} : vector<1x64xf32> to vector<1x32xf32>
    %227 = vector.extract_strided_slice %225 {offsets = [0, 32], sizes = [1, 32], strides = [1, 1]} : vector<1x64xf32> to vector<1x32xf32>
    %228 = vector.extract_strided_slice %217 {offsets = [0, 64], sizes = [1, 32], strides = [1, 1]} : vector<1x96xf32> to vector<1x32xf32>
    %229 = vector.extract_strided_slice %216 {offsets = [0, 64], sizes = [1, 32], strides = [1, 1]} : vector<1x96xf32> to vector<1x32xf32>
    %230 = arith.mulf %226, %229 : vector<1x32xf32>
    %231 = arith.addf %228, %230 : vector<1x32xf32>
    %232 = math.tanh %231 : vector<1x32xf32>
    %cst_60 = arith.constant 1.000000e+00 : f32
    %233 = vector.broadcast %cst_60 : f32 to vector<1x32xf32>
    %234 = arith.subf %233, %227 : vector<1x32xf32>
    %235 = arith.mulf %234, %232 : vector<1x32xf32>
    %236 = arith.mulf %227, %214 : vector<1x32xf32>
    %237 = arith.addf %235, %236 : vector<1x32xf32>
    %cst_61 = arith.constant dense<0.000000e+00> : vector<1x96xf32>
    %238 = tpu.matmul %237, %210, %cst_61 {dimension_numbers = #tpu.dot_dimension_numbers<[1], [0], [0], [1], [0, 0, 1, 1], [], []>} : vector<1x32xf32>, vector<32x96xf32>, vector<1x96xf32> -> vector<1x96xf32>
    %239 = arith.addf %238, %212 : vector<1x96xf32>
    %240 = vector.extract_strided_slice %208 {offsets = [1, 0], sizes = [1, 96], strides = [1, 1]} : vector<8x96xf32> to vector<1x96xf32>
    %241 = vector.extract_strided_slice %240 {offsets = [0, 0], sizes = [1, 64], strides = [1, 1]} : vector<1x96xf32> to vector<1x64xf32>
    %242 = vector.extract_strided_slice %239 {offsets = [0, 0], sizes = [1, 64], strides = [1, 1]} : vector<1x96xf32> to vector<1x64xf32>
    %243 = arith.addf %241, %242 : vector<1x64xf32>
    %244 = arith.negf %243 : vector<1x64xf32>
    %245 = math.exp %244 : vector<1x64xf32>
    %cst_62 = arith.constant 1.000000e+00 : f32
    %246 = vector.broadcast %cst_62 : f32 to vector<1x64xf32>
    %247 = arith.addf %246, %245 : vector<1x64xf32>
    %248 = arith.divf %246, %247 : vector<1x64xf32>
    %249 = vector.extract_strided_slice %248 {offsets = [0, 0], sizes = [1, 32], strides = [1, 1]} : vector<1x64xf32> to vector<1x32xf32>
    %250 = vector.extract_strided_slice %248 {offsets = [0, 32], sizes = [1, 32], strides = [1, 1]} : vector<1x64xf32> to vector<1x32xf32>
    %251 = vector.extract_strided_slice %240 {offsets = [0, 64], sizes = [1, 32], strides = [1, 1]} : vector<1x96xf32> to vector<1x32xf32>
    %252 = vector.extract_strided_slice %239 {offsets = [0, 64], sizes = [1, 32], strides = [1, 1]} : vector<1x96xf32> to vector<1x32xf32>
    %253 = arith.mulf %249, %252 : vector<1x32xf32>
    %254 = arith.addf %251, %253 : vector<1x32xf32>
    %255 = math.tanh %254 : vector<1x32xf32>
    %cst_63 = arith.constant 1.000000e+00 : f32
    %256 = vector.broadcast %cst_63 : f32 to vector<1x32xf32>
    %257 = arith.subf %256, %250 : vector<1x32xf32>
    %258 = arith.mulf %257, %255 : vector<1x32xf32>
    %259 = arith.mulf %250, %237 : vector<1x32xf32>
    %260 = arith.addf %258, %259 : vector<1x32xf32>
    %cst_64 = arith.constant dense<0.000000e+00> : vector<1x96xf32>
    %261 = tpu.matmul %260, %210, %cst_64 {dimension_numbers = #tpu.dot_dimension_numbers<[1], [0], [0], [1], [0, 0, 1, 1], [], []>} : vector<1x32xf32>, vector<32x96xf32>, vector<1x96xf32> -> vector<1x96xf32>
    %262 = arith.addf %261, %212 : vector<1x96xf32>
    %263 = vector.extract_strided_slice %208 {offsets = [2, 0], sizes = [1, 96], strides = [1, 1]} : vector<8x96xf32> to vector<1x96xf32>
    %264 = vector.extract_strided_slice %263 {offsets = [0, 0], sizes = [1, 64], strides = [1, 1]} : vector<1x96xf32> to vector<1x64xf32>
    %265 = vector.extract_strided_slice %262 {offsets = [0, 0], sizes = [1, 64], strides = [1, 1]} : vector<1x96xf32> to vector<1x64xf32>
    %266 = arith.addf %264, %265 : vector<1x64xf32>
    %267 = arith.negf %266 : vector<1x64xf32>
    %268 = math.exp %267 : vector<1x64xf32>
    %cst_65 = arith.constant 1.000000e+00 : f32
    %269 = vector.broadcast %cst_65 : f32 to vector<1x64xf32>
    %270 = arith.addf %269, %268 : vector<1x64xf32>
    %271 = arith.divf %269, %270 : vector<1x64xf32>
    %272 = vector.extract_strided_slice %271 {offsets = [0, 0], sizes = [1, 32], strides = [1, 1]} : vector<1x64xf32> to vector<1x32xf32>
    %273 = vector.extract_strided_slice %271 {offsets = [0, 32], sizes = [1, 32], strides = [1, 1]} : vector<1x64xf32> to vector<1x32xf32>
    %274 = vector.extract_strided_slice %263 {offsets = [0, 64], sizes = [1, 32], strides = [1, 1]} : vector<1x96xf32> to vector<1x32xf32>
    %275 = vector.extract_strided_slice %262 {offsets = [0, 64], sizes = [1, 32], strides = [1, 1]} : vector<1x96xf32> to vector<1x32xf32>
    %276 = arith.mulf %272, %275 : vector<1x32xf32>
    %277 = arith.addf %274, %276 : vector<1x32xf32>
    %278 = math.tanh %277 : vector<1x32xf32>
    %cst_66 = arith.constant 1.000000e+00 : f32
    %279 = vector.broadcast %cst_66 : f32 to vector<1x32xf32>
    %280 = arith.subf %279, %273 : vector<1x32xf32>
    %281 = arith.mulf %280, %278 : vector<1x32xf32>
    %282 = arith.mulf %273, %260 : vector<1x32xf32>
    %283 = arith.addf %281, %282 : vector<1x32xf32>
    %cst_67 = arith.constant dense<0.000000e+00> : vector<1x96xf32>
    %284 = tpu.matmul %283, %210, %cst_67 {dimension_numbers = #tpu.dot_dimension_numbers<[1], [0], [0], [1], [0, 0, 1, 1], [], []>} : vector<1x32xf32>, vector<32x96xf32>, vector<1x96xf32> -> vector<1x96xf32>
    %285 = arith.addf %284, %212 : vector<1x96xf32>
    %286 = vector.extract_strided_slice %208 {offsets = [3, 0], sizes = [1, 96], strides = [1, 1]} : vector<8x96xf32> to vector<1x96xf32>
    %287 = vector.extract_strided_slice %286 {offsets = [0, 0], sizes = [1, 64], strides = [1, 1]} : vector<1x96xf32> to vector<1x64xf32>
    %288 = vector.extract_strided_slice %285 {offsets = [0, 0], sizes = [1, 64], strides = [1, 1]} : vector<1x96xf32> to vector<1x64xf32>
    %289 = arith.addf %287, %288 : vector<1x64xf32>
    %290 = arith.negf %289 : vector<1x64xf32>
    %291 = math.exp %290 : vector<1x64xf32>
    %cst_68 = arith.constant 1.000000e+00 : f32
    %292 = vector.broadcast %cst_68 : f32 to vector<1x64xf32>
    %293 = arith.addf %292, %291 : vector<1x64xf32>
    %294 = arith.divf %292, %293 : vector<1x64xf32>
    %295 = vector.extract_strided_slice %294 {offsets = [0, 0], sizes = [1, 32], strides = [1, 1]} : vector<1x64xf32> to vector<1x32xf32>
    %296 = vector.extract_strided_slice %294 {offsets = [0, 32], sizes = [1, 32], strides = [1, 1]} : vector<1x64xf32> to vector<1x32xf32>
    %297 = vector.extract_strided_slice %286 {offsets = [0, 64], sizes = [1, 32], strides = [1, 1]} : vector<1x96xf32> to vector<1x32xf32>
    %298 = vector.extract_strided_slice %285 {offsets = [0, 64], sizes = [1, 32], strides = [1, 1]} : vector<1x96xf32> to vector<1x32xf32>
    %299 = arith.mulf %295, %298 : vector<1x32xf32>
    %300 = arith.addf %297, %299 : vector<1x32xf32>
    %301 = math.tanh %300 : vector<1x32xf32>
    %cst_69 = arith.constant 1.000000e+00 : f32
    %302 = vector.broadcast %cst_69 : f32 to vector<1x32xf32>
    %303 = arith.subf %302, %296 : vector<1x32xf32>
    %304 = arith.mulf %303, %301 : vector<1x32xf32>
    %305 = arith.mulf %296, %283 : vector<1x32xf32>
    %306 = arith.addf %304, %305 : vector<1x32xf32>
    %cst_70 = arith.constant dense<0.000000e+00> : vector<1x96xf32>
    %307 = tpu.matmul %306, %210, %cst_70 {dimension_numbers = #tpu.dot_dimension_numbers<[1], [0], [0], [1], [0, 0, 1, 1], [], []>} : vector<1x32xf32>, vector<32x96xf32>, vector<1x96xf32> -> vector<1x96xf32>
    %308 = arith.addf %307, %212 : vector<1x96xf32>
    %309 = vector.extract_strided_slice %208 {offsets = [4, 0], sizes = [1, 96], strides = [1, 1]} : vector<8x96xf32> to vector<1x96xf32>
    %310 = vector.extract_strided_slice %309 {offsets = [0, 0], sizes = [1, 64], strides = [1, 1]} : vector<1x96xf32> to vector<1x64xf32>
    %311 = vector.extract_strided_slice %308 {offsets = [0, 0], sizes = [1, 64], strides = [1, 1]} : vector<1x96xf32> to vector<1x64xf32>
    %312 = arith.addf %310, %311 : vector<1x64xf32>
    %313 = arith.negf %312 : vector<1x64xf32>
    %314 = math.exp %313 : vector<1x64xf32>
    %cst_71 = arith.constant 1.000000e+00 : f32
    %315 = vector.broadcast %cst_71 : f32 to vector<1x64xf32>
    %316 = arith.addf %315, %314 : vector<1x64xf32>
    %317 = arith.divf %315, %316 : vector<1x64xf32>
    %318 = vector.extract_strided_slice %317 {offsets = [0, 0], sizes = [1, 32], strides = [1, 1]} : vector<1x64xf32> to vector<1x32xf32>
    %319 = vector.extract_strided_slice %317 {offsets = [0, 32], sizes = [1, 32], strides = [1, 1]} : vector<1x64xf32> to vector<1x32xf32>
    %320 = vector.extract_strided_slice %309 {offsets = [0, 64], sizes = [1, 32], strides = [1, 1]} : vector<1x96xf32> to vector<1x32xf32>
    %321 = vector.extract_strided_slice %308 {offsets = [0, 64], sizes = [1, 32], strides = [1, 1]} : vector<1x96xf32> to vector<1x32xf32>
    %322 = arith.mulf %318, %321 : vector<1x32xf32>
    %323 = arith.addf %320, %322 : vector<1x32xf32>
    %324 = math.tanh %323 : vector<1x32xf32>
    %cst_72 = arith.constant 1.000000e+00 : f32
    %325 = vector.broadcast %cst_72 : f32 to vector<1x32xf32>
    %326 = arith.subf %325, %319 : vector<1x32xf32>
    %327 = arith.mulf %326, %324 : vector<1x32xf32>
    %328 = arith.mulf %319, %306 : vector<1x32xf32>
    %329 = arith.addf %327, %328 : vector<1x32xf32>
    %cst_73 = arith.constant dense<0.000000e+00> : vector<1x96xf32>
    %330 = tpu.matmul %329, %210, %cst_73 {dimension_numbers = #tpu.dot_dimension_numbers<[1], [0], [0], [1], [0, 0, 1, 1], [], []>} : vector<1x32xf32>, vector<32x96xf32>, vector<1x96xf32> -> vector<1x96xf32>
    %331 = arith.addf %330, %212 : vector<1x96xf32>
    %332 = vector.extract_strided_slice %208 {offsets = [5, 0], sizes = [1, 96], strides = [1, 1]} : vector<8x96xf32> to vector<1x96xf32>
    %333 = vector.extract_strided_slice %332 {offsets = [0, 0], sizes = [1, 64], strides = [1, 1]} : vector<1x96xf32> to vector<1x64xf32>
    %334 = vector.extract_strided_slice %331 {offsets = [0, 0], sizes = [1, 64], strides = [1, 1]} : vector<1x96xf32> to vector<1x64xf32>
    %335 = arith.addf %333, %334 : vector<1x64xf32>
    %336 = arith.negf %335 : vector<1x64xf32>
    %337 = math.exp %336 : vector<1x64xf32>
    %cst_74 = arith.constant 1.000000e+00 : f32
    %338 = vector.broadcast %cst_74 : f32 to vector<1x64xf32>
    %339 = arith.addf %338, %337 : vector<1x64xf32>
    %340 = arith.divf %338, %339 : vector<1x64xf32>
    %341 = vector.extract_strided_slice %340 {offsets = [0, 0], sizes = [1, 32], strides = [1, 1]} : vector<1x64xf32> to vector<1x32xf32>
    %342 = vector.extract_strided_slice %340 {offsets = [0, 32], sizes = [1, 32], strides = [1, 1]} : vector<1x64xf32> to vector<1x32xf32>
    %343 = vector.extract_strided_slice %332 {offsets = [0, 64], sizes = [1, 32], strides = [1, 1]} : vector<1x96xf32> to vector<1x32xf32>
    %344 = vector.extract_strided_slice %331 {offsets = [0, 64], sizes = [1, 32], strides = [1, 1]} : vector<1x96xf32> to vector<1x32xf32>
    %345 = arith.mulf %341, %344 : vector<1x32xf32>
    %346 = arith.addf %343, %345 : vector<1x32xf32>
    %347 = math.tanh %346 : vector<1x32xf32>
    %cst_75 = arith.constant 1.000000e+00 : f32
    %348 = vector.broadcast %cst_75 : f32 to vector<1x32xf32>
    %349 = arith.subf %348, %342 : vector<1x32xf32>
    %350 = arith.mulf %349, %347 : vector<1x32xf32>
    %351 = arith.mulf %342, %329 : vector<1x32xf32>
    %352 = arith.addf %350, %351 : vector<1x32xf32>
    %cst_76 = arith.constant dense<0.000000e+00> : vector<1x96xf32>
    %353 = tpu.matmul %352, %210, %cst_76 {dimension_numbers = #tpu.dot_dimension_numbers<[1], [0], [0], [1], [0, 0, 1, 1], [], []>} : vector<1x32xf32>, vector<32x96xf32>, vector<1x96xf32> -> vector<1x96xf32>
    %354 = arith.addf %353, %212 : vector<1x96xf32>
    %355 = vector.extract_strided_slice %208 {offsets = [6, 0], sizes = [1, 96], strides = [1, 1]} : vector<8x96xf32> to vector<1x96xf32>
    %356 = vector.extract_strided_slice %355 {offsets = [0, 0], sizes = [1, 64], strides = [1, 1]} : vector<1x96xf32> to vector<1x64xf32>
    %357 = vector.extract_strided_slice %354 {offsets = [0, 0], sizes = [1, 64], strides = [1, 1]} : vector<1x96xf32> to vector<1x64xf32>
    %358 = arith.addf %356, %357 : vector<1x64xf32>
    %359 = arith.negf %358 : vector<1x64xf32>
    %360 = math.exp %359 : vector<1x64xf32>
    %cst_77 = arith.constant 1.000000e+00 : f32
    %361 = vector.broadcast %cst_77 : f32 to vector<1x64xf32>
    %362 = arith.addf %361, %360 : vector<1x64xf32>
    %363 = arith.divf %361, %362 : vector<1x64xf32>
    %364 = vector.extract_strided_slice %363 {offsets = [0, 0], sizes = [1, 32], strides = [1, 1]} : vector<1x64xf32> to vector<1x32xf32>
    %365 = vector.extract_strided_slice %363 {offsets = [0, 32], sizes = [1, 32], strides = [1, 1]} : vector<1x64xf32> to vector<1x32xf32>
    %366 = vector.extract_strided_slice %355 {offsets = [0, 64], sizes = [1, 32], strides = [1, 1]} : vector<1x96xf32> to vector<1x32xf32>
    %367 = vector.extract_strided_slice %354 {offsets = [0, 64], sizes = [1, 32], strides = [1, 1]} : vector<1x96xf32> to vector<1x32xf32>
    %368 = arith.mulf %364, %367 : vector<1x32xf32>
    %369 = arith.addf %366, %368 : vector<1x32xf32>
    %370 = math.tanh %369 : vector<1x32xf32>
    %cst_78 = arith.constant 1.000000e+00 : f32
    %371 = vector.broadcast %cst_78 : f32 to vector<1x32xf32>
    %372 = arith.subf %371, %365 : vector<1x32xf32>
    %373 = arith.mulf %372, %370 : vector<1x32xf32>
    %374 = arith.mulf %365, %352 : vector<1x32xf32>
    %375 = arith.addf %373, %374 : vector<1x32xf32>
    %cst_79 = arith.constant dense<0.000000e+00> : vector<1x96xf32>
    %376 = tpu.matmul %375, %210, %cst_79 {dimension_numbers = #tpu.dot_dimension_numbers<[1], [0], [0], [1], [0, 0, 1, 1], [], []>} : vector<1x32xf32>, vector<32x96xf32>, vector<1x96xf32> -> vector<1x96xf32>
    %377 = arith.addf %376, %212 : vector<1x96xf32>
    %378 = vector.extract_strided_slice %208 {offsets = [7, 0], sizes = [1, 96], strides = [1, 1]} : vector<8x96xf32> to vector<1x96xf32>
    %379 = vector.extract_strided_slice %378 {offsets = [0, 0], sizes = [1, 64], strides = [1, 1]} : vector<1x96xf32> to vector<1x64xf32>
    %380 = vector.extract_strided_slice %377 {offsets = [0, 0], sizes = [1, 64], strides = [1, 1]} : vector<1x96xf32> to vector<1x64xf32>
    %381 = arith.addf %379, %380 : vector<1x64xf32>
    %382 = arith.negf %381 : vector<1x64xf32>
    %383 = math.exp %382 : vector<1x64xf32>
    %cst_80 = arith.constant 1.000000e+00 : f32
    %384 = vector.broadcast %cst_80 : f32 to vector<1x64xf32>
    %385 = arith.addf %384, %383 : vector<1x64xf32>
    %386 = arith.divf %384, %385 : vector<1x64xf32>
    %387 = vector.extract_strided_slice %386 {offsets = [0, 0], sizes = [1, 32], strides = [1, 1]} : vector<1x64xf32> to vector<1x32xf32>
    %388 = vector.extract_strided_slice %386 {offsets = [0, 32], sizes = [1, 32], strides = [1, 1]} : vector<1x64xf32> to vector<1x32xf32>
    %389 = vector.extract_strided_slice %378 {offsets = [0, 64], sizes = [1, 32], strides = [1, 1]} : vector<1x96xf32> to vector<1x32xf32>
    %390 = vector.extract_strided_slice %377 {offsets = [0, 64], sizes = [1, 32], strides = [1, 1]} : vector<1x96xf32> to vector<1x32xf32>
    %391 = arith.mulf %387, %390 : vector<1x32xf32>
    %392 = arith.addf %389, %391 : vector<1x32xf32>
    %393 = math.tanh %392 : vector<1x32xf32>
    %cst_81 = arith.constant 1.000000e+00 : f32
    %394 = vector.broadcast %cst_81 : f32 to vector<1x32xf32>
    %395 = arith.subf %394, %388 : vector<1x32xf32>
    %396 = arith.mulf %395, %393 : vector<1x32xf32>
    %397 = arith.mulf %388, %375 : vector<1x32xf32>
    %398 = arith.addf %396, %397 : vector<1x32xf32>
    %c1_82 = arith.constant 1 : index
    %c0_83 = arith.constant 0 : index
    %c0_84 = arith.constant 0 : index
    %399 = vector.load %arg7[%c1_82, %c0_83, %c0_84] : memref<2x1x32xf32, #tpu.memory_space<vmem>>, vector<1x1x32xf32>
    %400 = vector.shape_cast %399 : vector<1x1x32xf32> to vector<1x32xf32>
    %401 = vector.shape_cast %398 : vector<1x32xf32> to vector<1x1x32xf32>
    tpu.vector_store %arg7[%c1_82, %c0_83, %c0_84], %401 {strides = array<i32>} : memref<2x1x32xf32, #tpu.memory_space<vmem>>, vector<1x1x32xf32>,
    %402 = tpu.concatenate %237, %260, %283, %306, %329, %352, %375, %398 in 0 : vector<1x32xf32>, vector<1x32xf32>, vector<1x32xf32>, vector<1x32xf32>, vector<1x32xf32>, vector<1x32xf32>, vector<1x32xf32>, vector<1x32xf32> -> vector<8x32xf32>
    %c0_85 = arith.constant 0 : index
    %c0_86 = arith.constant 0 : index
    %403 = vector.load %arg6[%c0_85, %c0_86] : memref<8x32xf32, #tpu.memory_space<vmem>>, vector<8x32xf32>
    tpu.vector_store %arg6[%c0_85, %c0_86], %402 {strides = array<i32>} : memref<8x32xf32, #tpu.memory_space<vmem>>, vector<8x32xf32>,
    return
  }
}

</mosaic_0001>

<llo_original>
// kernel: generator_forward.1
$region0: #{generator_forward.1}
  #allocation0 [shape = 'u32[]', space=smem, size = 0x4, offset = 0x4, fixed_abs, tag = 'smem constant byte address 0x4 - core index']
  #allocation1 [shape = 'u32[144,128]{1,0:T(1,128)}', space=vmem, size = 0x12000, scoped, tag = 'internal scratch']
  %s0 = inlined_call_operand.vmem [shape: f32[8,32], index: 0, kind: input, shape index: {}]
  %s1 = inlined_call_operand.vmem [shape: f32[2,1,32], index: 1, kind: input, shape index: {}, may-alias: {1,7}]
  %s2 = inlined_call_operand.hbm [shape: f32[2,32,96], index: 2, kind: input, shape index: {}]
  %s3 = inlined_call_operand.hbm [shape: f32[2,32,96], index: 3, kind: input, shape index: {}]
  %s4 = inlined_call_operand.vmem [shape: f32[2,1,96], index: 4, kind: input, shape index: {}]
  %s5 = inlined_call_operand.vmem [shape: f32[2,1,96], index: 5, kind: input, shape index: {}]
  %s6 = inlined_call_operand.hbm [shape: f32[8,32], index: 6, kind: output, shape index: {0}]
  %s7 = inlined_call_operand.vmem [shape: f32[2,1,32], index: 7, kind: output, shape index: {1}, may-alias: {1,7}]
  %8 = xla_tuple %s6, %s7
  %s9 = sld [smem:[#allocation0]]
  $region50: #{generator_forward.1} parent=0
    _
  %s11 = ssub.s32 1, %s9
  %s12 = scalar_select 0, %s11, %s9
  $region1: #{generator_forward.1} parent=0
    #allocation2 [shape = 'u8[32768]{0}', space=vmem, size = 0x8000, scoped, tag = 'input window, operand 2, single buffered']
    #allocation3 [shape = 's32[1]{0}', space=sflag, size = 0x4, scoped, tag = 'scoped memory for generator_forward.1']
    #allocation4 [shape = 's32[1]{0}', space=sflag, size = 0x4, scoped, tag = 'scoped memory for generator_forward.1']
    #allocation5 [shape = 'u8[32768]{0}', space=vmem, size = 0x8000, scoped, tag = 'input window, operand 3, single buffered']
    #allocation6 [shape = 's32[1]{0}', space=sflag, size = 0x4, scoped, tag = 'scoped memory for generator_forward.1']
    #allocation7 [shape = 'u8[4096]{0}', space=vmem, size = 0x1000, scoped, tag = 'output window, operand 0, single buffered']
    %13 = vsyncpa [#allocation3], 0
    %14 = vsyncpa [#allocation6], 0
    %15 = vsyncpa [#allocation4], 0
    // Predicated region
    $region2: #{generator_forward.1} parent=1 // pred_check
      _
    $region3: #{generator_forward.1} parent=1 // pred_check_branch
      %17 = sbr.rel (0) target = $region5
    $region4: #{generator_forward.1} parent=1 // pred_region
      _
    $region5: #{generator_forward.1} parent=1 // pred_fallthru
      _
    // Predicated region
    $region6: #{generator_forward.1} parent=1 // pred_check
      _
    $region7: #{generator_forward.1} parent=1 // pred_check_branch
      %19 = sbr.rel (0) target = $region9
    $region8: #{generator_forward.1} parent=1 // pred_region
      _
    $region9: #{generator_forward.1} parent=1 // pred_fallthru
      _
    // Predicated region
    $region10: #{generator_forward.1} parent=1 // pred_check
      _
    $region11: #{generator_forward.1} parent=1 // pred_check_branch
      %21 = sbr.rel (0) target = $region13
    $region12: #{generator_forward.1} parent=1 // pred_region
      %s23 = ssub.s32 1024, 1024
      %24 = vsyncadd [#allocation3], %s23
      %s25 = sshll.u32 [#allocation2], 4
      %s26 = int_to_ptr.vmem [resolvable:$true] %s25
      %31 = dma.hbm_to_vmem [thread:$0]  %s2, 1024, %s26, [#allocation3], 128, 128, 8
    $region13: #{generator_forward.1} parent=1 // pred_fallthru
      _
    // Predicated region
    $region14: #{generator_forward.1} parent=1 // pred_check
      _
    $region15: #{generator_forward.1} parent=1 // pred_check_branch
      %33 = sbr.rel (0) target = $region17
    $region16: #{generator_forward.1} parent=1 // pred_region
      %s35 = ssub.s32 1024, 1024
      %36 = vsyncadd [#allocation6], %s35
      %s37 = sshll.u32 [#allocation5], 4
      %s38 = int_to_ptr.vmem [resolvable:$true] %s37
      %43 = dma.hbm_to_vmem [thread:$0]  %s3, 1024, %s38, [#allocation6], 128, 128, 8
    $region17: #{generator_forward.1} parent=1 // pred_fallthru
      _
    // Predicated region
    $region18: #{generator_forward.1} parent=1 // pred_check
      _
    $region19: #{generator_forward.1} parent=1 // pred_check_branch
      %45 = sbr.rel (0) target = $region21
    $region20: #{generator_forward.1} parent=1 // pred_region
      _
    $region21: #{generator_forward.1} parent=1 // pred_fallthru
      _
    // Predicated region
    $region22: #{generator_forward.1} parent=1 // pred_check
      _
    $region23: #{generator_forward.1} parent=1 // pred_check_branch
      %47 = sbr.rel (0) target = $region25
    $region24: #{generator_forward.1} parent=1 // pred_region
      _
    $region25: #{generator_forward.1} parent=1 // pred_fallthru
      _
    // Predicated region
    $region26: #{generator_forward.1} parent=1 // pred_check
      _
    $region27: #{generator_forward.1} parent=1 // pred_check_branch
      %49 = sbr.rel (0) target = $region29
    $region28: #{generator_forward.1} parent=1 // pred_region
      %50 = dma.done [#allocation3], 1024
    $region29: #{generator_forward.1} parent=1 // pred_fallthru
      _
    // Predicated region
    $region30: #{generator_forward.1} parent=1 // pred_check
      _
    $region31: #{generator_forward.1} parent=1 // pred_check_branch
      %52 = sbr.rel (0) target = $region33
    $region32: #{generator_forward.1} parent=1 // pred_region
      %53 = dma.done [#allocation6], 1024
    $region33: #{generator_forward.1} parent=1 // pred_fallthru
      _
    %v54 = vld [vmem:[%s0] sm:$0xff]
    %v55 = vld [vmem:[#allocation2] sm:$0xff]
    %v56 = vld [vmem:[#allocation2 + $0x8] sm:$0xff]
    %v57 = vld [vmem:[#allocation2 + $0x10] sm:$0xff]
    %v58 = vld [vmem:[#allocation2 + $0x18] sm:$0xff]
    %v59 = vld [vmem:[%s4] sm:$0x1]
    %v61 = vlaneseq
    %v62 = vshrl.u32 %v61, 7
    %v63 = vsub.s32 0, %v62
    %v64 = vrot.slane %v59, %v63
    %vm66 = vcmask 261120
    %v68 = vsel %vm66, %v54, 0
    %70 = vmatprep.subr.mxu0 0.0
    %71 = vmatpush1.msra.mxu0 %v55
    %72 = vmatprep.subr.mxu0 0.0
    %73 = vmatpush1.msra.mxu0 %v56
    %74 = vmatprep.subr.mxu0 0.0
    %75 = vmatpush1.msra.mxu0 %v57
    %76 = vmatprep.subr.mxu0 0.0
    %77 = vmatpush1.msra.mxu0 %v58
    %78 = vmatprep.subr.mxu0 0.0
    %79 = vmatpush1.msra.mxu0 0.0
    %80 = vmatprep.subr.mxu0 0.0
    %81 = vmatpush1.msra.mxu0 0.0
    %82 = vmatprep.subr.mxu0 0.0
    %83 = vmatpush1.msra.mxu0 0.0
    %84 = vmatprep.subr.mxu0 0.0
    %85 = vmatpush1.msra.mxu0 0.0
    %86 = vmatprep.subr.mxu0 0.0
    %87 = vmatpush1.msra.mxu0 0.0
    %88 = vmatprep.subr.mxu0 0.0
    %89 = vmatpush1.msra.mxu0 0.0
    %90 = vmatprep.subr.mxu0 0.0
    %91 = vmatpush1.msra.mxu0 0.0
    %92 = vmatprep.subr.mxu0 0.0
    %93 = vmatpush1.msra.mxu0 0.0
    %94 = vmatprep.subr.mxu0 0.0
    %95 = vmatpush1.msra.mxu0 0.0
    %96 = vmatprep.subr.mxu0 0.0
    %97 = vmatpush1.msra.mxu0 0.0
    %98 = vmatprep.subr.mxu0 0.0
    %99 = vmatpush1.msra.mxu0 0.0
    %100 = vmatprep.subr.mxu0 0.0
    %101 = vmatpush1.msra.mxu0 0.0
    %102 = vmatprep.subr.mxu0 0.0
    %103 = vmatpush1.msra.mxu0 0.0
    %104 = vmatprep.subr.mxu0 0.0
    %105 = vmatpush1.msra.mxu0 0.0
    %106 = vmatprep.subr.mxu0 0.0
    %107 = vmatpush1.msra.mxu0 0.0
    %108 = vmatprep.subr.mxu0 0.0
    %109 = vmatpush1.msra.mxu0 0.0
    %110 = vmatprep.subr.mxu0 0.0
    %111 = vmatpush1.msra.mxu0 0.0
    %112 = vmatprep.subr.mxu0 0.0
    %113 = vmatpush1.msra.mxu0 0.0
    %114 = vmatprep.subr.mxu0 0.0
    %115 = vmatpush1.msra.mxu0 0.0
    %116 = vmatprep.subr.mxu0 0.0
    %117 = vmatpush1.msra.mxu0 0.0
    %118 = vmatprep.subr.mxu0 0.0
    %119 = vmatpush1.msra.mxu0 0.0
    %120 = vmatprep.subr.mxu0 0.0
    %121 = vmatpush1.msra.mxu0 0.0
    %122 = vmatprep.subr.mxu0 0.0
    %123 = vmatpush1.msra.mxu0 0.0
    %124 = vmatprep.subr.mxu0 0.0
    %125 = vmatpush1.msra.mxu0 0.0
    %126 = vmatprep.subr.mxu0 0.0
    %127 = vmatpush1.msra.mxu0 0.0
    %128 = vmatprep.subr.mxu0 0.0
    %129 = vmatpush1.msra.mxu0 0.0
    %130 = vmatprep.subr.mxu0 0.0
    %131 = vmatpush1.msra.mxu0 0.0
    %132 = vmatprep.subr.mxu0 0.0
    %133 = vmatpush1.msra.mxu0 0.0
    %134 = vmatprep.mubr.f32.mxu0 0.0
    %135 = vmatmul.mubr.f32.gmra.mrb[0].mxu0 %v68
    %v136 = vpop.f32.mrb[0].mxu0
    %v137 = vadd.f32 %v64, %v136
    %v138 = vpop.f32.mrb[0].mxu0
    %139 = vdwg.mxu0
    %v140 = vld [vmem:[#allocation5] sm:$0xff]
    %v141 = vld [vmem:[#allocation5 + $0x8] sm:$0xff]
    %v142 = vld [vmem:[#allocation5 + $0x10] sm:$0xff]
    %v143 = vld [vmem:[#allocation5 + $0x18] sm:$0xff]
    %v144 = vld [vmem:[%s5] sm:$0x1]
    %v145 = vld [vmem:[%s1] sm:$0x1]
    %v147 = vsel %vm66, %v145, 0
    %149 = vmatprep.subr.mxu0 0.0
    %150 = vmatpush1.msra.mxu0 %v140
    %151 = vmatprep.subr.mxu0 0.0
    %152 = vmatpush1.msra.mxu0 %v141
    %153 = vmatprep.subr.mxu0 0.0
    %154 = vmatpush1.msra.mxu0 %v142
    %155 = vmatprep.subr.mxu0 0.0
    %156 = vmatpush1.msra.mxu0 %v143
    %157 = vmatprep.subr.mxu0 0.0
    %158 = vmatpush1.msra.mxu0 0.0
    %159 = vmatprep.subr.mxu0 0.0
    %160 = vmatpush1.msra.mxu0 0.0
    %161 = vmatprep.subr.mxu0 0.0
    %162 = vmatpush1.msra.mxu0 0.0
    %163 = vmatprep.subr.mxu0 0.0
    %164 = vmatpush1.msra.mxu0 0.0
    %165 = vmatprep.subr.mxu0 0.0
    %166 = vmatpush1.msra.mxu0 0.0
    %167 = vmatprep.subr.mxu0 0.0
    %168 = vmatpush1.msra.mxu0 0.0
    %169 = vmatprep.subr.mxu0 0.0
    %170 = vmatpush1.msra.mxu0 0.0
    %171 = vmatprep.subr.mxu0 0.0
    %172 = vmatpush1.msra.mxu0 0.0
    %173 = vmatprep.subr.mxu0 0.0
    %174 = vmatpush1.msra.mxu0 0.0
    %175 = vmatprep.subr.mxu0 0.0
    %176 = vmatpush1.msra.mxu0 0.0
    %177 = vmatprep.subr.mxu0 0.0
    %178 = vmatpush1.msra.mxu0 0.0
    %179 = vmatprep.subr.mxu0 0.0
    %180 = vmatpush1.msra.mxu0 0.0
    %181 = vmatprep.subr.mxu0 0.0
    %182 = vmatpush1.msra.mxu0 0.0
    %183 = vmatprep.subr.mxu0 0.0
    %184 = vmatpush1.msra.mxu0 0.0
    %185 = vmatprep.subr.mxu0 0.0
    %186 = vmatpush1.msra.mxu0 0.0
    %187 = vmatprep.subr.mxu0 0.0
    %188 = vmatpush1.msra.mxu0 0.0
    %189 = vmatprep.subr.mxu0 0.0
    %190 = vmatpush1.msra.mxu0 0.0
    %191 = vmatprep.subr.mxu0 0.0
    %192 = vmatpush1.msra.mxu0 0.0
    %193 = vmatprep.subr.mxu0 0.0
    %194 = vmatpush1.msra.mxu0 0.0
    %195 = vmatprep.subr.mxu0 0.0
    %196 = vmatpush1.msra.mxu0 0.0
    %197 = vmatprep.subr.mxu0 0.0
    %198 = vmatpush1.msra.mxu0 0.0
    %199 = vmatprep.subr.mxu0 0.0
    %200 = vmatpush1.msra.mxu0 0.0
    %201 = vmatprep.subr.mxu0 0.0
    %202 = vmatpush1.msra.mxu0 0.0
    %203 = vmatprep.subr.mxu0 0.0
    %204 = vmatpush1.msra.mxu0 0.0
    %205 = vmatprep.subr.mxu0 0.0
    %206 = vmatpush1.msra.mxu0 0.0
    %207 = vmatprep.subr.mxu0 0.0
    %208 = vmatpush1.msra.mxu0 0.0
    %209 = vmatprep.subr.mxu0 0.0
    %210 = vmatpush1.msra.mxu0 0.0
    %211 = vmatprep.subr.mxu0 0.0
    %212 = vmatpush1.msra.mxu0 0.0
    %213 = vmatprep.mubr.f32.mxu0 0.0
    %214 = vmatmul.mubr.f32.gmra.mrb[0].mxu0 %v147
    %v215 = vpop.f32.mrb[0].mxu0
    %v216 = vadd.f32 %v144, %v215
    %v217 = vpop.f32.mrb[0].mxu0
    %218 = vdwg.mxu0
    %v219 = vadd.f32 %v137, %v216
    %v220 = vxor.u32 %v219, 2147483648
    %v221 = vmul.f32 %v220, 1.442695
    %v222 = vpow.pop %v221
    %v223 = vadd.f32 %v222, 1.0
    %v224 = vrcp.pop %v223
    %v225 = vmul.f32 1.0, %v224
    %227 = vrot.lane.b32.xlu0 %v216, 64
    %v228 = vpop.permute.xlu0 %227
    %v230 = vmul.f32 %v225, %v228
    %232 = vrot.lane.b32.xlu0 %v230, 64
    %v233 = vpop.permute.xlu0 %232
    %v235 = vadd.f32 %v137, %v233
    %v236 = vtanh.pop %v235
    %v237 = vsub.f32 1.0, %v225
    %239 = vrot.lane.b32.xlu0 %v236, 96
    %v240 = vpop.permute.xlu0 %239
    %v242 = vmul.f32 %v237, %v240
    %v243 = vlaneseq
    %v244 = vshrl.u32 %v243, 7
    %v245 = vsub.s32 0, %v244
    %v246 = vrot.slane %v145, %v245
    %247 = vrot.lane.b32.xlu0 %v246, 32
    %v248 = vpop.permute.xlu0 %247
    %v250 = vmul.f32 %v225, %v248
    %v251 = vadd.f32 %v242, %v250
    %253 = vrot.lane.b32.xlu0 %v251, 96
    %v254 = vpop.permute.xlu0 %253
    %v255 = vsel %vm66, %v254, 0
    %257 = vmatprep.subr.mxu0 0.0
    %258 = vmatpush1.msra.mxu0 %v140
    %259 = vmatprep.subr.mxu0 0.0
    %260 = vmatpush1.msra.mxu0 %v141
    %261 = vmatprep.subr.mxu0 0.0
    %262 = vmatpush1.msra.mxu0 %v142
    %263 = vmatprep.subr.mxu0 0.0
    %264 = vmatpush1.msra.mxu0 %v143
    %265 = vmatprep.subr.mxu0 0.0
    %266 = vmatpush1.msra.mxu0 0.0
    %267 = vmatprep.subr.mxu0 0.0
    %268 = vmatpush1.msra.mxu0 0.0
    %269 = vmatprep.subr.mxu0 0.0
    %270 = vmatpush1.msra.mxu0 0.0
    %271 = vmatprep.subr.mxu0 0.0
    %272 = vmatpush1.msra.mxu0 0.0
    %273 = vmatprep.subr.mxu0 0.0
    %274 = vmatpush1.msra.mxu0 0.0
    %275 = vmatprep.subr.mxu0 0.0
    %276 = vmatpush1.msra.mxu0 0.0
    %277 = vmatprep.subr.mxu0 0.0
    %278 = vmatpush1.msra.mxu0 0.0
    %279 = vmatprep.subr.mxu0 0.0
    %280 = vmatpush1.msra.mxu0 0.0
    %281 = vmatprep.subr.mxu0 0.0
    %282 = vmatpush1.msra.mxu0 0.0
    %283 = vmatprep.subr.mxu0 0.0
    %284 = vmatpush1.msra.mxu0 0.0
    %285 = vmatprep.subr.mxu0 0.0
    %286 = vmatpush1.msra.mxu0 0.0
    %287 = vmatprep.subr.mxu0 0.0
    %288 = vmatpush1.msra.mxu0 0.0
    %289 = vmatprep.subr.mxu0 0.0
    %290 = vmatpush1.msra.mxu0 0.0
    %291 = vmatprep.subr.mxu0 0.0
    %292 = vmatpush1.msra.mxu0 0.0
    %293 = vmatprep.subr.mxu0 0.0
    %294 = vmatpush1.msra.mxu0 0.0
    %295 = vmatprep.subr.mxu0 0.0
    %296 = vmatpush1.msra.mxu0 0.0
    %297 = vmatprep.subr.mxu0 0.0
    %298 = vmatpush1.msra.mxu0 0.0
    %299 = vmatprep.subr.mxu0 0.0
    %300 = vmatpush1.msra.mxu0 0.0
    %301 = vmatprep.subr.mxu0 0.0
    %302 = vmatpush1.msra.mxu0 0.0
    %303 = vmatprep.subr.mxu0 0.0
    %304 = vmatpush1.msra.mxu0 0.0
    %305 = vmatprep.subr.mxu0 0.0
    %306 = vmatpush1.msra.mxu0 0.0
    %307 = vmatprep.subr.mxu0 0.0
    %308 = vmatpush1.msra.mxu0 0.0
    %309 = vmatprep.subr.mxu0 0.0
    %310 = vmatpush1.msra.mxu0 0.0
    %311 = vmatprep.subr.mxu0 0.0
    %312 = vmatpush1.msra.mxu0 0.0
    %313 = vmatprep.subr.mxu0 0.0
    %314 = vmatpush1.msra.mxu0 0.0
    %315 = vmatprep.subr.mxu0 0.0
    %316 = vmatpush1.msra.mxu0 0.0
    %317 = vmatprep.subr.mxu0 0.0
    %318 = vmatpush1.msra.mxu0 0.0
    %319 = vmatprep.subr.mxu0 0.0
    %320 = vmatpush1.msra.mxu0 0.0
    %321 = vmatprep.mubr.f32.mxu0 0.0
    %322 = vmatmul.mubr.f32.gmra.mrb[0].mxu0 %v255
    %v323 = vpop.f32.mrb[0].mxu0
    %v324 = vadd.f32 %v144, %v323
    %v325 = vpop.f32.mrb[0].mxu0
    %326 = vdwg.mxu0
    %v328 = vrot.slane %v324, 7
    %v330 = vadd.f32 %v137, %v328
    %v331 = vxor.u32 %v330, 2147483648
    %v332 = vmul.f32 %v331, 1.442695
    %v333 = vpow.pop %v332
    %v334 = vadd.f32 %v333, 1.0
    %v335 = vrcp.pop %v334
    %v336 = vmul.f32 1.0, %v335
    %337 = vrot.lane.b32.xlu0 %v328, 64
    %v338 = vpop.permute.xlu0 %337
    %v340 = vmul.f32 %v336, %v338
    %342 = vrot.lane.b32.xlu0 %v340, 64
    %v343 = vpop.permute.xlu0 %342
    %v345 = vadd.f32 %v137, %v343
    %v346 = vtanh.pop %v345
    %v347 = vsub.f32 1.0, %v336
    %349 = vrot.lane.b32.xlu0 %v346, 96
    %v350 = vpop.permute.xlu0 %349
    %v352 = vmul.f32 %v347, %v350
    %v353 = vrot.slane %v251, 7
    %v355 = vmul.f32 %v336, %v353
    %v356 = vadd.f32 %v352, %v355
    %v358 = vrot.slane %v356, 1
    %359 = vrot.lane.b32.xlu0 %v358, 96
    %v360 = vpop.permute.xlu0 %359
    %v361 = vsel %vm66, %v360, 0
    %363 = vmatprep.subr.mxu0 0.0
    %364 = vmatpush1.msra.mxu0 %v140
    %365 = vmatprep.subr.mxu0 0.0
    %366 = vmatpush1.msra.mxu0 %v141
    %367 = vmatprep.subr.mxu0 0.0
    %368 = vmatpush1.msra.mxu0 %v142
    %369 = vmatprep.subr.mxu0 0.0
    %370 = vmatpush1.msra.mxu0 %v143
    %371 = vmatprep.subr.mxu0 0.0
    %372 = vmatpush1.msra.mxu0 0.0
    %373 = vmatprep.subr.mxu0 0.0
    %374 = vmatpush1.msra.mxu0 0.0
    %375 = vmatprep.subr.mxu0 0.0
    %376 = vmatpush1.msra.mxu0 0.0
    %377 = vmatprep.subr.mxu0 0.0
    %378 = vmatpush1.msra.mxu0 0.0
    %379 = vmatprep.subr.mxu0 0.0
    %380 = vmatpush1.msra.mxu0 0.0
    %381 = vmatprep.subr.mxu0 0.0
    %382 = vmatpush1.msra.mxu0 0.0
    %383 = vmatprep.subr.mxu0 0.0
    %384 = vmatpush1.msra.mxu0 0.0
    %385 = vmatprep.subr.mxu0 0.0
    %386 = vmatpush1.msra.mxu0 0.0
    %387 = vmatprep.subr.mxu0 0.0
    %388 = vmatpush1.msra.mxu0 0.0
    %389 = vmatprep.subr.mxu0 0.0
    %390 = vmatpush1.msra.mxu0 0.0
    %391 = vmatprep.subr.mxu0 0.0
    %392 = vmatpush1.msra.mxu0 0.0
    %393 = vmatprep.subr.mxu0 0.0
    %394 = vmatpush1.msra.mxu0 0.0
    %395 = vmatprep.subr.mxu0 0.0
    %396 = vmatpush1.msra.mxu0 0.0
    %397 = vmatprep.subr.mxu0 0.0
    %398 = vmatpush1.msra.mxu0 0.0
    %399 = vmatprep.subr.mxu0 0.0
    %400 = vmatpush1.msra.mxu0 0.0
    %401 = vmatprep.subr.mxu0 0.0
    %402 = vmatpush1.msra.mxu0 0.0
    %403 = vmatprep.subr.mxu0 0.0
    %404 = vmatpush1.msra.mxu0 0.0
    %405 = vmatprep.subr.mxu0 0.0
    %406 = vmatpush1.msra.mxu0 0.0
    %407 = vmatprep.subr.mxu0 0.0
    %408 = vmatpush1.msra.mxu0 0.0
    %409 = vmatprep.subr.mxu0 0.0
    %410 = vmatpush1.msra.mxu0 0.0
    %411 = vmatprep.subr.mxu0 0.0
    %412 = vmatpush1.msra.mxu0 0.0
    %413 = vmatprep.subr.mxu0 0.0
    %414 = vmatpush1.msra.mxu0 0.0
    %415 = vmatprep.subr.mxu0 0.0
    %416 = vmatpush1.msra.mxu0 0.0
    %417 = vmatprep.subr.mxu0 0.0
    %418 = vmatpush1.msra.mxu0 0.0
    %419 = vmatprep.subr.mxu0 0.0
    %420 = vmatpush1.msra.mxu0 0.0
    %421 = vmatprep.subr.mxu0 0.0
    %422 = vmatpush1.msra.mxu0 0.0
    %423 = vmatprep.subr.mxu0 0.0
    %424 = vmatpush1.msra.mxu0 0.0
    %425 = vmatprep.subr.mxu0 0.0
    %426 = vmatpush1.msra.mxu0 0.0
    %427 = vmatprep.mubr.f32.mxu0 0.0
    %428 = vmatmul.mubr.f32.gmra.mrb[0].mxu0 %v361
    %v429 = vpop.f32.mrb[0].mxu0
    %v430 = vadd.f32 %v144, %v429
    %v431 = vpop.f32.mrb[0].mxu0
    %432 = vdwg.mxu0
    %v434 = vrot.slane %v430, 6
    %v436 = vadd.f32 %v137, %v434
    %v437 = vxor.u32 %v436, 2147483648
    %v438 = vmul.f32 %v437, 1.442695
    %v439 = vpow.pop %v438
    %v440 = vadd.f32 %v439, 1.0
    %v441 = vrcp.pop %v440
    %v442 = vmul.f32 1.0, %v441
    %443 = vrot.lane.b32.xlu0 %v434, 64
    %v444 = vpop.permute.xlu0 %443
    %v446 = vmul.f32 %v442, %v444
    %448 = vrot.lane.b32.xlu0 %v446, 64
    %v449 = vpop.permute.xlu0 %448
    %v451 = vadd.f32 %v137, %v449
    %v452 = vtanh.pop %v451
    %v453 = vsub.f32 1.0, %v442
    %455 = vrot.lane.b32.xlu0 %v452, 96
    %v456 = vpop.permute.xlu0 %455
    %v458 = vmul.f32 %v453, %v456
    %v459 = vrot.slane %v356, 7
    %v461 = vmul.f32 %v442, %v459
    %v462 = vadd.f32 %v458, %v461
    %v464 = vrot.slane %v462, 2
    %465 = vrot.lane.b32.xlu0 %v464, 96
    %v466 = vpop.permute.xlu0 %465
    %v467 = vsel %vm66, %v466, 0
    %469 = vmatprep.subr.mxu0 0.0
    %470 = vmatpush1.msra.mxu0 %v140
    %471 = vmatprep.subr.mxu0 0.0
    %472 = vmatpush1.msra.mxu0 %v141
    %473 = vmatprep.subr.mxu0 0.0
    %474 = vmatpush1.msra.mxu0 %v142
    %475 = vmatprep.subr.mxu0 0.0
    %476 = vmatpush1.msra.mxu0 %v143
    %477 = vmatprep.subr.mxu0 0.0
    %478 = vmatpush1.msra.mxu0 0.0
    %479 = vmatprep.subr.mxu0 0.0
    %480 = vmatpush1.msra.mxu0 0.0
    %481 = vmatprep.subr.mxu0 0.0
    %482 = vmatpush1.msra.mxu0 0.0
    %483 = vmatprep.subr.mxu0 0.0
    %484 = vmatpush1.msra.mxu0 0.0
    %485 = vmatprep.subr.mxu0 0.0
    %486 = vmatpush1.msra.mxu0 0.0
    %487 = vmatprep.subr.mxu0 0.0
    %488 = vmatpush1.msra.mxu0 0.0
    %489 = vmatprep.subr.mxu0 0.0
    %490 = vmatpush1.msra.mxu0 0.0
    %491 = vmatprep.subr.mxu0 0.0
    %492 = vmatpush1.msra.mxu0 0.0
    %493 = vmatprep.subr.mxu0 0.0
    %494 = vmatpush1.msra.mxu0 0.0
    %495 = vmatprep.subr.mxu0 0.0
    %496 = vmatpush1.msra.mxu0 0.0
    %497 = vmatprep.subr.mxu0 0.0
    %498 = vmatpush1.msra.mxu0 0.0
    %499 = vmatprep.subr.mxu0 0.0
    %500 = vmatpush1.msra.mxu0 0.0
    %501 = vmatprep.subr.mxu0 0.0
    %502 = vmatpush1.msra.mxu0 0.0
    %503 = vmatprep.subr.mxu0 0.0
    %504 = vmatpush1.msra.mxu0 0.0
    %505 = vmatprep.subr.mxu0 0.0
    %506 = vmatpush1.msra.mxu0 0.0
    %507 = vmatprep.subr.mxu0 0.0
    %508 = vmatpush1.msra.mxu0 0.0
    %509 = vmatprep.subr.mxu0 0.0
    %510 = vmatpush1.msra.mxu0 0.0
    %511 = vmatprep.subr.mxu0 0.0
    %512 = vmatpush1.msra.mxu0 0.0
    %513 = vmatprep.subr.mxu0 0.0
    %514 = vmatpush1.msra.mxu0 0.0
    %515 = vmatprep.subr.mxu0 0.0
    %516 = vmatpush1.msra.mxu0 0.0
    %517 = vmatprep.subr.mxu0 0.0
    %518 = vmatpush1.msra.mxu0 0.0
    %519 = vmatprep.subr.mxu0 0.0
    %520 = vmatpush1.msra.mxu0 0.0
    %521 = vmatprep.subr.mxu0 0.0
    %522 = vmatpush1.msra.mxu0 0.0
    %523 = vmatprep.subr.mxu0 0.0
    %524 = vmatpush1.msra.mxu0 0.0
    %525 = vmatprep.subr.mxu0 0.0
    %526 = vmatpush1.msra.mxu0 0.0
    %527 = vmatprep.subr.mxu0 0.0
    %528 = vmatpush1.msra.mxu0 0.0
    %529 = vmatprep.subr.mxu0 0.0
    %530 = vmatpush1.msra.mxu0 0.0
    %531 = vmatprep.subr.mxu0 0.0
    %532 = vmatpush1.msra.mxu0 0.0
    %533 = vmatprep.mubr.f32.mxu0 0.0
    %534 = vmatmul.mubr.f32.gmra.mrb[0].mxu0 %v467
    %v535 = vpop.f32.mrb[0].mxu0
    %v536 = vadd.f32 %v144, %v535
    %v537 = vpop.f32.mrb[0].mxu0
    %538 = vdwg.mxu0
    %v540 = vrot.slane %v536, 5
    %v542 = vadd.f32 %v137, %v540
    %v543 = vxor.u32 %v542, 2147483648
    %v544 = vmul.f32 %v543, 1.442695
    %v545 = vpow.pop %v544
    %v546 = vadd.f32 %v545, 1.0
    %v547 = vrcp.pop %v546
    %v548 = vmul.f32 1.0, %v547
    %549 = vrot.lane.b32.xlu0 %v540, 64
    %v550 = vpop.permute.xlu0 %549
    %v552 = vmul.f32 %v548, %v550
    %554 = vrot.lane.b32.xlu0 %v552, 64
    %v555 = vpop.permute.xlu0 %554
    %v557 = vadd.f32 %v137, %v555
    %v558 = vtanh.pop %v557
    %v559 = vsub.f32 1.0, %v548
    %561 = vrot.lane.b32.xlu0 %v558, 96
    %v562 = vpop.permute.xlu0 %561
    %v564 = vmul.f32 %v559, %v562
    %v565 = vrot.slane %v462, 7
    %v567 = vmul.f32 %v548, %v565
    %v568 = vadd.f32 %v564, %v567
    %v570 = vrot.slane %v568, 3
    %571 = vrot.lane.b32.xlu0 %v570, 96
    %v572 = vpop.permute.xlu0 %571
    %v573 = vsel %vm66, %v572, 0
    %575 = vmatprep.subr.mxu0 0.0
    %576 = vmatpush1.msra.mxu0 %v140
    %577 = vmatprep.subr.mxu0 0.0
    %578 = vmatpush1.msra.mxu0 %v141
    %579 = vmatprep.subr.mxu0 0.0
    %580 = vmatpush1.msra.mxu0 %v142
    %581 = vmatprep.subr.mxu0 0.0
    %582 = vmatpush1.msra.mxu0 %v143
    %583 = vmatprep.subr.mxu0 0.0
    %584 = vmatpush1.msra.mxu0 0.0
    %585 = vmatprep.subr.mxu0 0.0
    %586 = vmatpush1.msra.mxu0 0.0
    %587 = vmatprep.subr.mxu0 0.0
    %588 = vmatpush1.msra.mxu0 0.0
    %589 = vmatprep.subr.mxu0 0.0
    %590 = vmatpush1.msra.mxu0 0.0
    %591 = vmatprep.subr.mxu0 0.0
    %592 = vmatpush1.msra.mxu0 0.0
    %593 = vmatprep.subr.mxu0 0.0
    %594 = vmatpush1.msra.mxu0 0.0
    %595 = vmatprep.subr.mxu0 0.0
    %596 = vmatpush1.msra.mxu0 0.0
    %597 = vmatprep.subr.mxu0 0.0
    %598 = vmatpush1.msra.mxu0 0.0
    %599 = vmatprep.subr.mxu0 0.0
    %600 = vmatpush1.msra.mxu0 0.0
    %601 = vmatprep.subr.mxu0 0.0
    %602 = vmatpush1.msra.mxu0 0.0
    %603 = vmatprep.subr.mxu0 0.0
    %604 = vmatpush1.msra.mxu0 0.0
    %605 = vmatprep.subr.mxu0 0.0
    %606 = vmatpush1.msra.mxu0 0.0
    %607 = vmatprep.subr.mxu0 0.0
    %608 = vmatpush1.msra.mxu0 0.0
    %609 = vmatprep.subr.mxu0 0.0
    %610 = vmatpush1.msra.mxu0 0.0
    %611 = vmatprep.subr.mxu0 0.0
    %612 = vmatpush1.msra.mxu0 0.0
    %613 = vmatprep.subr.mxu0 0.0
    %614 = vmatpush1.msra.mxu0 0.0
    %615 = vmatprep.subr.mxu0 0.0
    %616 = vmatpush1.msra.mxu0 0.0
    %617 = vmatprep.subr.mxu0 0.0
    %618 = vmatpush1.msra.mxu0 0.0
    %619 = vmatprep.subr.mxu0 0.0
    %620 = vmatpush1.msra.mxu0 0.0
    %621 = vmatprep.subr.mxu0 0.0
    %622 = vmatpush1.msra.mxu0 0.0
    %623 = vmatprep.subr.mxu0 0.0
    %624 = vmatpush1.msra.mxu0 0.0
    %625 = vmatprep.subr.mxu0 0.0
    %626 = vmatpush1.msra.mxu0 0.0
    %627 = vmatprep.subr.mxu0 0.0
    %628 = vmatpush1.msra.mxu0 0.0
    %629 = vmatprep.subr.mxu0 0.0
    %630 = vmatpush1.msra.mxu0 0.0
    %631 = vmatprep.subr.mxu0 0.0
    %632 = vmatpush1.msra.mxu0 0.0
    %633 = vmatprep.subr.mxu0 0.0
    %634 = vmatpush1.msra.mxu0 0.0
    %635 = vmatprep.subr.mxu0 0.0
    %636 = vmatpush1.msra.mxu0 0.0
    %637 = vmatprep.subr.mxu0 0.0
    %638 = vmatpush1.msra.mxu0 0.0
    %639 = vmatprep.mubr.f32.mxu0 0.0
    %640 = vmatmul.mubr.f32.gmra.mrb[0].mxu0 %v573
    %v641 = vpop.f32.mrb[0].mxu0
    %v642 = vadd.f32 %v144, %v641
    %v643 = vpop.f32.mrb[0].mxu0
    %644 = vdwg.mxu0
    %v646 = vrot.slane %v642, 4
    %v648 = vadd.f32 %v137, %v646
    %v649 = vxor.u32 %v648, 2147483648
    %v650 = vmul.f32 %v649, 1.442695
    %v651 = vpow.pop %v650
    %v652 = vadd.f32 %v651, 1.0
    %v653 = vrcp.pop %v652
    %v654 = vmul.f32 1.0, %v653
    %655 = vrot.lane.b32.xlu0 %v646, 64
    %v656 = vpop.permute.xlu0 %655
    %v658 = vmul.f32 %v654, %v656
    %660 = vrot.lane.b32.xlu0 %v658, 64
    %v661 = vpop.permute.xlu0 %660
    %v663 = vadd.f32 %v137, %v661
    %v664 = vtanh.pop %v663
    %v665 = vsub.f32 1.0, %v654
    %667 = vrot.lane.b32.xlu0 %v664, 96
    %v668 = vpop.permute.xlu0 %667
    %v670 = vmul.f32 %v665, %v668
    %v671 = vrot.slane %v568, 7
    %v673 = vmul.f32 %v654, %v671
    %v674 = vadd.f32 %v670, %v673
    %v676 = vrot.slane %v674, 4
    %677 = vrot.lane.b32.xlu0 %v676, 96
    %v678 = vpop.permute.xlu0 %677
    %v679 = vsel %vm66, %v678, 0
    %681 = vmatprep.subr.mxu0 0.0
    %682 = vmatpush1.msra.mxu0 %v140
    %683 = vmatprep.subr.mxu0 0.0
    %684 = vmatpush1.msra.mxu0 %v141
    %685 = vmatprep.subr.mxu0 0.0
    %686 = vmatpush1.msra.mxu0 %v142
    %687 = vmatprep.subr.mxu0 0.0
    %688 = vmatpush1.msra.mxu0 %v143
    %689 = vmatprep.subr.mxu0 0.0
    %690 = vmatpush1.msra.mxu0 0.0
    %691 = vmatprep.subr.mxu0 0.0
    %692 = vmatpush1.msra.mxu0 0.0
    %693 = vmatprep.subr.mxu0 0.0
    %694 = vmatpush1.msra.mxu0 0.0
    %695 = vmatprep.subr.mxu0 0.0
    %696 = vmatpush1.msra.mxu0 0.0
    %697 = vmatprep.subr.mxu0 0.0
    %698 = vmatpush1.msra.mxu0 0.0
    %699 = vmatprep.subr.mxu0 0.0
    %700 = vmatpush1.msra.mxu0 0.0
    %701 = vmatprep.subr.mxu0 0.0
    %702 = vmatpush1.msra.mxu0 0.0
    %703 = vmatprep.subr.mxu0 0.0
    %704 = vmatpush1.msra.mxu0 0.0
    %705 = vmatprep.subr.mxu0 0.0
    %706 = vmatpush1.msra.mxu0 0.0
    %707 = vmatprep.subr.mxu0 0.0
    %708 = vmatpush1.msra.mxu0 0.0
    %709 = vmatprep.subr.mxu0 0.0
    %710 = vmatpush1.msra.mxu0 0.0
    %711 = vmatprep.subr.mxu0 0.0
    %712 = vmatpush1.msra.mxu0 0.0
    %713 = vmatprep.subr.mxu0 0.0
    %714 = vmatpush1.msra.mxu0 0.0
    %715 = vmatprep.subr.mxu0 0.0
    %716 = vmatpush1.msra.mxu0 0.0
    %717 = vmatprep.subr.mxu0 0.0
    %718 = vmatpush1.msra.mxu0 0.0
    %719 = vmatprep.subr.mxu0 0.0
    %720 = vmatpush1.msra.mxu0 0.0
    %721 = vmatprep.subr.mxu0 0.0
    %722 = vmatpush1.msra.mxu0 0.0
    %723 = vmatprep.subr.mxu0 0.0
    %724 = vmatpush1.msra.mxu0 0.0
    %725 = vmatprep.subr.mxu0 0.0
    %726 = vmatpush1.msra.mxu0 0.0
    %727 = vmatprep.subr.mxu0 0.0
    %728 = vmatpush1.msra.mxu0 0.0
    %729 = vmatprep.subr.mxu0 0.0
    %730 = vmatpush1.msra.mxu0 0.0
    %731 = vmatprep.subr.mxu0 0.0
    %732 = vmatpush1.msra.mxu0 0.0
    %733 = vmatprep.subr.mxu0 0.0
    %734 = vmatpush1.msra.mxu0 0.0
    %735 = vmatprep.subr.mxu0 0.0
    %736 = vmatpush1.msra.mxu0 0.0
    %737 = vmatprep.subr.mxu0 0.0
    %738 = vmatpush1.msra.mxu0 0.0
    %739 = vmatprep.subr.mxu0 0.0
    %740 = vmatpush1.msra.mxu0 0.0
    %741 = vmatprep.subr.mxu0 0.0
    %742 = vmatpush1.msra.mxu0 0.0
    %743 = vmatprep.subr.mxu0 0.0
    %744 = vmatpush1.msra.mxu0 0.0
    %745 = vmatprep.mubr.f32.mxu0 0.0
    %746 = vmatmul.mubr.f32.gmra.mrb[0].mxu0 %v679
    %v747 = vpop.f32.mrb[0].mxu0
    %v748 = vadd.f32 %v144, %v747
    %v749 = vpop.f32.mrb[0].mxu0
    %750 = vdwg.mxu0
    %v752 = vrot.slane %v748, 3
    %v754 = vadd.f32 %v137, %v752
    %v755 = vxor.u32 %v754, 2147483648
    %v756 = vmul.f32 %v755, 1.442695
    %v757 = vpow.pop %v756
    %v758 = vadd.f32 %v757, 1.0
    %v759 = vrcp.pop %v758
    %v760 = vmul.f32 1.0, %v759
    %761 = vrot.lane.b32.xlu0 %v752, 64
    %v762 = vpop.permute.xlu0 %761
    %v764 = vmul.f32 %v760, %v762
    %766 = vrot.lane.b32.xlu0 %v764, 64
    %v767 = vpop.permute.xlu0 %766
    %v769 = vadd.f32 %v137, %v767
    %v770 = vtanh.pop %v769
    %v771 = vsub.f32 1.0, %v760
    %773 = vrot.lane.b32.xlu0 %v770, 96
    %v774 = vpop.permute.xlu0 %773
    %v776 = vmul.f32 %v771, %v774
    %v777 = vrot.slane %v674, 7
    %v779 = vmul.f32 %v760, %v777
    %v780 = vadd.f32 %v776, %v779
    %v782 = vrot.slane %v780, 5
    %783 = vrot.lane.b32.xlu0 %v782, 96
    %v784 = vpop.permute.xlu0 %783
    %v785 = vsel %vm66, %v784, 0
    %787 = vmatprep.subr.mxu0 0.0
    %788 = vmatpush1.msra.mxu0 %v140
    %789 = vmatprep.subr.mxu0 0.0
    %790 = vmatpush1.msra.mxu0 %v141
    %791 = vmatprep.subr.mxu0 0.0
    %792 = vmatpush1.msra.mxu0 %v142
    %793 = vmatprep.subr.mxu0 0.0
    %794 = vmatpush1.msra.mxu0 %v143
    %795 = vmatprep.subr.mxu0 0.0
    %796 = vmatpush1.msra.mxu0 0.0
    %797 = vmatprep.subr.mxu0 0.0
    %798 = vmatpush1.msra.mxu0 0.0
    %799 = vmatprep.subr.mxu0 0.0
    %800 = vmatpush1.msra.mxu0 0.0
    %801 = vmatprep.subr.mxu0 0.0
    %802 = vmatpush1.msra.mxu0 0.0
    %803 = vmatprep.subr.mxu0 0.0
    %804 = vmatpush1.msra.mxu0 0.0
    %805 = vmatprep.subr.mxu0 0.0
    %806 = vmatpush1.msra.mxu0 0.0
    %807 = vmatprep.subr.mxu0 0.0
    %808 = vmatpush1.msra.mxu0 0.0
    %809 = vmatprep.subr.mxu0 0.0
    %810 = vmatpush1.msra.mxu0 0.0
    %811 = vmatprep.subr.mxu0 0.0
    %812 = vmatpush1.msra.mxu0 0.0
    %813 = vmatprep.subr.mxu0 0.0
    %814 = vmatpush1.msra.mxu0 0.0
    %815 = vmatprep.subr.mxu0 0.0
    %816 = vmatpush1.msra.mxu0 0.0
    %817 = vmatprep.subr.mxu0 0.0
    %818 = vmatpush1.msra.mxu0 0.0
    %819 = vmatprep.subr.mxu0 0.0
    %820 = vmatpush1.msra.mxu0 0.0
    %821 = vmatprep.subr.mxu0 0.0
    %822 = vmatpush1.msra.mxu0 0.0
    %823 = vmatprep.subr.mxu0 0.0
    %824 = vmatpush1.msra.mxu0 0.0
    %825 = vmatprep.subr.mxu0 0.0
    %826 = vmatpush1.msra.mxu0 0.0
    %827 = vmatprep.subr.mxu0 0.0
    %828 = vmatpush1.msra.mxu0 0.0
    %829 = vmatprep.subr.mxu0 0.0
    %830 = vmatpush1.msra.mxu0 0.0
    %831 = vmatprep.subr.mxu0 0.0
    %832 = vmatpush1.msra.mxu0 0.0
    %833 = vmatprep.subr.mxu0 0.0
    %834 = vmatpush1.msra.mxu0 0.0
    %835 = vmatprep.subr.mxu0 0.0
    %836 = vmatpush1.msra.mxu0 0.0
    %837 = vmatprep.subr.mxu0 0.0
    %838 = vmatpush1.msra.mxu0 0.0
    %839 = vmatprep.subr.mxu0 0.0
    %840 = vmatpush1.msra.mxu0 0.0
    %841 = vmatprep.subr.mxu0 0.0
    %842 = vmatpush1.msra.mxu0 0.0
    %843 = vmatprep.subr.mxu0 0.0
    %844 = vmatpush1.msra.mxu0 0.0
    %845 = vmatprep.subr.mxu0 0.0
    %846 = vmatpush1.msra.mxu0 0.0
    %847 = vmatprep.subr.mxu0 0.0
    %848 = vmatpush1.msra.mxu0 0.0
    %849 = vmatprep.subr.mxu0 0.0
    %850 = vmatpush1.msra.mxu0 0.0
    %851 = vmatprep.mubr.f32.mxu0 0.0
    %852 = vmatmul.mubr.f32.gmra.mrb[0].mxu0 %v785
    %v853 = vpop.f32.mrb[0].mxu0
    %v854 = vadd.f32 %v144, %v853
    %v855 = vpop.f32.mrb[0].mxu0
    %856 = vdwg.mxu0
    %v858 = vrot.slane %v854, 2
    %v860 = vadd.f32 %v137, %v858
    %v861 = vxor.u32 %v860, 2147483648
    %v862 = vmul.f32 %v861, 1.442695
    %v863 = vpow.pop %v862
    %v864 = vadd.f32 %v863, 1.0
    %v865 = vrcp.pop %v864
    %v866 = vmul.f32 1.0, %v865
    %867 = vrot.lane.b32.xlu0 %v858, 64
    %v868 = vpop.permute.xlu0 %867
    %v870 = vmul.f32 %v866, %v868
    %872 = vrot.lane.b32.xlu0 %v870, 64
    %v873 = vpop.permute.xlu0 %872
    %v875 = vadd.f32 %v137, %v873
    %v876 = vtanh.pop %v875
    %v877 = vsub.f32 1.0, %v866
    %879 = vrot.lane.b32.xlu0 %v876, 96
    %v880 = vpop.permute.xlu0 %879
    %v882 = vmul.f32 %v877, %v880
    %v883 = vrot.slane %v780, 7
    %v885 = vmul.f32 %v866, %v883
    %v886 = vadd.f32 %v882, %v885
    %v888 = vrot.slane %v886, 6
    %889 = vrot.lane.b32.xlu0 %v888, 96
    %v890 = vpop.permute.xlu0 %889
    %v891 = vsel %vm66, %v890, 0
    %893 = vmatprep.subr.mxu0 0.0
    %894 = vmatpush1.msra.mxu0 %v140
    %895 = vmatprep.subr.mxu0 0.0
    %896 = vmatpush1.msra.mxu0 %v141
    %897 = vmatprep.subr.mxu0 0.0
    %898 = vmatpush1.msra.mxu0 %v142
    %899 = vmatprep.subr.mxu0 0.0
    %900 = vmatpush1.msra.mxu0 %v143
    %901 = vmatprep.subr.mxu0 0.0
    %902 = vmatpush1.msra.mxu0 0.0
    %903 = vmatprep.subr.mxu0 0.0
    %904 = vmatpush1.msra.mxu0 0.0
    %905 = vmatprep.subr.mxu0 0.0
    %906 = vmatpush1.msra.mxu0 0.0
    %907 = vmatprep.subr.mxu0 0.0
    %908 = vmatpush1.msra.mxu0 0.0
    %909 = vmatprep.subr.mxu0 0.0
    %910 = vmatpush1.msra.mxu0 0.0
    %911 = vmatprep.subr.mxu0 0.0
    %912 = vmatpush1.msra.mxu0 0.0
    %913 = vmatprep.subr.mxu0 0.0
    %914 = vmatpush1.msra.mxu0 0.0
    %915 = vmatprep.subr.mxu0 0.0
    %916 = vmatpush1.msra.mxu0 0.0
    %917 = vmatprep.subr.mxu0 0.0
    %918 = vmatpush1.msra.mxu0 0.0
    %919 = vmatprep.subr.mxu0 0.0
    %920 = vmatpush1.msra.mxu0 0.0
    %921 = vmatprep.subr.mxu0 0.0
    %922 = vmatpush1.msra.mxu0 0.0
    %923 = vmatprep.subr.mxu0 0.0
    %924 = vmatpush1.msra.mxu0 0.0
    %925 = vmatprep.subr.mxu0 0.0
    %926 = vmatpush1.msra.mxu0 0.0
    %927 = vmatprep.subr.mxu0 0.0
    %928 = vmatpush1.msra.mxu0 0.0
    %929 = vmatprep.subr.mxu0 0.0
    %930 = vmatpush1.msra.mxu0 0.0
    %931 = vmatprep.subr.mxu0 0.0
    %932 = vmatpush1.msra.mxu0 0.0
    %933 = vmatprep.subr.mxu0 0.0
    %934 = vmatpush1.msra.mxu0 0.0
    %935 = vmatprep.subr.mxu0 0.0
    %936 = vmatpush1.msra.mxu0 0.0
    %937 = vmatprep.subr.mxu0 0.0
    %938 = vmatpush1.msra.mxu0 0.0
    %939 = vmatprep.subr.mxu0 0.0
    %940 = vmatpush1.msra.mxu0 0.0
    %941 = vmatprep.subr.mxu0 0.0
    %942 = vmatpush1.msra.mxu0 0.0
    %943 = vmatprep.subr.mxu0 0.0
    %944 = vmatpush1.msra.mxu0 0.0
    %945 = vmatprep.subr.mxu0 0.0
    %946 = vmatpush1.msra.mxu0 0.0
    %947 = vmatprep.subr.mxu0 0.0
    %948 = vmatpush1.msra.mxu0 0.0
    %949 = vmatprep.subr.mxu0 0.0
    %950 = vmatpush1.msra.mxu0 0.0
    %951 = vmatprep.subr.mxu0 0.0
    %952 = vmatpush1.msra.mxu0 0.0
    %953 = vmatprep.subr.mxu0 0.0
    %954 = vmatpush1.msra.mxu0 0.0
    %955 = vmatprep.subr.mxu0 0.0
    %956 = vmatpush1.msra.mxu0 0.0
    %957 = vmatprep.mubr.f32.mxu0 0.0
    %958 = vmatmul.mubr.f32.gmra.mrb[0].mxu0 %v891
    %v959 = vpop.f32.mrb[0].mxu0
    %v960 = vadd.f32 %v144, %v959
    %v961 = vpop.f32.mrb[0].mxu0
    %962 = vdwg.mxu0
    %v964 = vrot.slane %v960, 1
    %v966 = vadd.f32 %v137, %v964
    %v967 = vxor.u32 %v966, 2147483648
    %v968 = vmul.f32 %v967, 1.442695
    %v969 = vpow.pop %v968
    %v970 = vadd.f32 %v969, 1.0
    %v971 = vrcp.pop %v970
    %v972 = vmul.f32 1.0, %v971
    %973 = vrot.lane.b32.xlu0 %v964, 64
    %v974 = vpop.permute.xlu0 %973
    %v976 = vmul.f32 %v972, %v974
    %978 = vrot.lane.b32.xlu0 %v976, 64
    %v979 = vpop.permute.xlu0 %978
    %v981 = vadd.f32 %v137, %v979
    %v982 = vtanh.pop %v981
    %v983 = vsub.f32 1.0, %v972
    %985 = vrot.lane.b32.xlu0 %v982, 96
    %v986 = vpop.permute.xlu0 %985
    %v988 = vmul.f32 %v983, %v986
    %v989 = vrot.slane %v886, 7
    %v991 = vmul.f32 %v972, %v989
    %v992 = vadd.f32 %v988, %v991
    %994 = vrot.lane.b32.xlu0 %v992, 96
    %v995 = vpop.permute.xlu0 %994
    %vm997 = vcmask 261127
    %998 = vst.msk [vmem:[%s7 - $0x7] sm:$0x80] %vm997, %v995
    %vm999 = vcmask 1040384
    %v1000 = vsel %vm999, %v251, %v356
    %vm1001 = vcmask 1041408
    %v1002 = vsel %vm1001, %v1000, %v462
    %vm1003 = vcmask 1042432
    %v1004 = vsel %vm1003, %v1002, %v568
    %vm1005 = vcmask 1043456
    %v1006 = vsel %vm1005, %v1004, %v674
    %vm1007 = vcmask 1044480
    %v1008 = vsel %vm1007, %v1006, %v780
    %vm1009 = vcmask 1045504
    %v1010 = vsel %vm1009, %v1008, %v886
    %vm1011 = vcmask 1046528
    %v1012 = vsel %vm1011, %v1010, %v992
    %s1013 = scalar_lea.vmem [#allocation2], 32
    %v1014 = vld [vmem:[%s1013] sm:$0xff]
    %v1015 = vld [vmem:[%s1013 + $0x8] sm:$0xff]
    %v1016 = vld [vmem:[%s1013 + $0x10] sm:$0xff]
    %v1017 = vld [vmem:[%s1013 + $0x18] sm:$0xff]
    %s1018 = scalar_lea.vmem %s4, 1
    %v1019 = vld [vmem:[%s1018] sm:$0x1]
    %v1021 = vlaneseq
    %v1022 = vshrl.u32 %v1021, 7
    %v1023 = vsub.s32 0, %v1022
    %v1024 = vrot.slane %v1019, %v1023
    %1027 = vrot.lane.b32.xlu0 %v1012, 96
    %v1028 = vpop.permute.xlu0 %1027
    %v1029 = vsel %vm66, %v1028, 0
    %1031 = vmatprep.subr.mxu0 0.0
    %1032 = vmatpush1.msra.mxu0 %v1014
    %1033 = vmatprep.subr.mxu0 0.0
    %1034 = vmatpush1.msra.mxu0 %v1015
    %1035 = vmatprep.subr.mxu0 0.0
    %1036 = vmatpush1.msra.mxu0 %v1016
    %1037 = vmatprep.subr.mxu0 0.0
    %1038 = vmatpush1.msra.mxu0 %v1017
    %1039 = vmatprep.subr.mxu0 0.0
    %1040 = vmatpush1.msra.mxu0 0.0
    %1041 = vmatprep.subr.mxu0 0.0
    %1042 = vmatpush1.msra.mxu0 0.0
    %1043 = vmatprep.subr.mxu0 0.0
    %1044 = vmatpush1.msra.mxu0 0.0
    %1045 = vmatprep.subr.mxu0 0.0
    %1046 = vmatpush1.msra.mxu0 0.0
    %1047 = vmatprep.subr.mxu0 0.0
    %1048 = vmatpush1.msra.mxu0 0.0
    %1049 = vmatprep.subr.mxu0 0.0
    %1050 = vmatpush1.msra.mxu0 0.0
    %1051 = vmatprep.subr.mxu0 0.0
    %1052 = vmatpush1.msra.mxu0 0.0
    %1053 = vmatprep.subr.mxu0 0.0
    %1054 = vmatpush1.msra.mxu0 0.0
    %1055 = vmatprep.subr.mxu0 0.0
    %1056 = vmatpush1.msra.mxu0 0.0
    %1057 = vmatprep.subr.mxu0 0.0
    %1058 = vmatpush1.msra.mxu0 0.0
    %1059 = vmatprep.subr.mxu0 0.0
    %1060 = vmatpush1.msra.mxu0 0.0
    %1061 = vmatprep.subr.mxu0 0.0
    %1062 = vmatpush1.msra.mxu0 0.0
    %1063 = vmatprep.subr.mxu0 0.0
    %1064 = vmatpush1.msra.mxu0 0.0
    %1065 = vmatprep.subr.mxu0 0.0
    %1066 = vmatpush1.msra.mxu0 0.0
    %1067 = vmatprep.subr.mxu0 0.0
    %1068 = vmatpush1.msra.mxu0 0.0
    %1069 = vmatprep.subr.mxu0 0.0
    %1070 = vmatpush1.msra.mxu0 0.0
    %1071 = vmatprep.subr.mxu0 0.0
    %1072 = vmatpush1.msra.mxu0 0.0
    %1073 = vmatprep.subr.mxu0 0.0
    %1074 = vmatpush1.msra.mxu0 0.0
    %1075 = vmatprep.subr.mxu0 0.0
    %1076 = vmatpush1.msra.mxu0 0.0
    %1077 = vmatprep.subr.mxu0 0.0
    %1078 = vmatpush1.msra.mxu0 0.0
    %1079 = vmatprep.subr.mxu0 0.0
    %1080 = vmatpush1.msra.mxu0 0.0
    %1081 = vmatprep.subr.mxu0 0.0
    %1082 = vmatpush1.msra.mxu0 0.0
    %1083 = vmatprep.subr.mxu0 0.0
    %1084 = vmatpush1.msra.mxu0 0.0
    %1085 = vmatprep.subr.mxu0 0.0
    %1086 = vmatpush1.msra.mxu0 0.0
    %1087 = vmatprep.subr.mxu0 0.0
    %1088 = vmatpush1.msra.mxu0 0.0
    %1089 = vmatprep.subr.mxu0 0.0
    %1090 = vmatpush1.msra.mxu0 0.0
    %1091 = vmatprep.subr.mxu0 0.0
    %1092 = vmatpush1.msra.mxu0 0.0
    %1093 = vmatprep.subr.mxu0 0.0
    %1094 = vmatpush1.msra.mxu0 0.0
    %1095 = vmatprep.mubr.f32.mxu0 0.0
    %1096 = vmatmul.mubr.f32.gmra.mrb[0].mxu0 %v1029
    %v1097 = vpop.f32.mrb[0].mxu0
    %v1098 = vadd.f32 %v1024, %v1097
    %v1099 = vpop.f32.mrb[0].mxu0
    %1100 = vdwg.mxu0
    %s1101 = scalar_lea.vmem [#allocation5], 32
    %v1102 = vld [vmem:[%s1101] sm:$0xff]
    %v1103 = vld [vmem:[%s1101 + $0x8] sm:$0xff]
    %v1104 = vld [vmem:[%s1101 + $0x10] sm:$0xff]
    %v1105 = vld [vmem:[%s1101 + $0x18] sm:$0xff]
    %s1106 = scalar_lea.vmem %s5, 1
    %v1107 = vld [vmem:[%s1106] sm:$0x1]
    %s1108 = scalar_lea.vmem %s1, 1
    %v1109 = vld [vmem:[%s1108] sm:$0x1]
    %v1111 = vsel %vm66, %v1109, 0
    %1113 = vmatprep.subr.mxu0 0.0
    %1114 = vmatpush1.msra.mxu0 %v1102
    %1115 = vmatprep.subr.mxu0 0.0
    %1116 = vmatpush1.msra.mxu0 %v1103
    %1117 = vmatprep.subr.mxu0 0.0
    %1118 = vmatpush1.msra.mxu0 %v1104
    %1119 = vmatprep.subr.mxu0 0.0
    %1120 = vmatpush1.msra.mxu0 %v1105
    %1121 = vmatprep.subr.mxu0 0.0
    %1122 = vmatpush1.msra.mxu0 0.0
    %1123 = vmatprep.subr.mxu0 0.0
    %1124 = vmatpush1.msra.mxu0 0.0
    %1125 = vmatprep.subr.mxu0 0.0
    %1126 = vmatpush1.msra.mxu0 0.0
    %1127 = vmatprep.subr.mxu0 0.0
    %1128 = vmatpush1.msra.mxu0 0.0
    %1129 = vmatprep.subr.mxu0 0.0
    %1130 = vmatpush1.msra.mxu0 0.0
    %1131 = vmatprep.subr.mxu0 0.0
    %1132 = vmatpush1.msra.mxu0 0.0
    %1133 = vmatprep.subr.mxu0 0.0
    %1134 = vmatpush1.msra.mxu0 0.0
    %1135 = vmatprep.subr.mxu0 0.0
    %1136 = vmatpush1.msra.mxu0 0.0
    %1137 = vmatprep.subr.mxu0 0.0
    %1138 = vmatpush1.msra.mxu0 0.0
    %1139 = vmatprep.subr.mxu0 0.0
    %1140 = vmatpush1.msra.mxu0 0.0
    %1141 = vmatprep.subr.mxu0 0.0
    %1142 = vmatpush1.msra.mxu0 0.0
    %1143 = vmatprep.subr.mxu0 0.0
    %1144 = vmatpush1.msra.mxu0 0.0
    %1145 = vmatprep.subr.mxu0 0.0
    %1146 = vmatpush1.msra.mxu0 0.0
    %1147 = vmatprep.subr.mxu0 0.0
    %1148 = vmatpush1.msra.mxu0 0.0
    %1149 = vmatprep.subr.mxu0 0.0
    %1150 = vmatpush1.msra.mxu0 0.0
    %1151 = vmatprep.subr.mxu0 0.0
    %1152 = vmatpush1.msra.mxu0 0.0
    %1153 = vmatprep.subr.mxu0 0.0
    %1154 = vmatpush1.msra.mxu0 0.0
    %1155 = vmatprep.subr.mxu0 0.0
    %1156 = vmatpush1.msra.mxu0 0.0
    %1157 = vmatprep.subr.mxu0 0.0
    %1158 = vmatpush1.msra.mxu0 0.0
    %1159 = vmatprep.subr.mxu0 0.0
    %1160 = vmatpush1.msra.mxu0 0.0
    %1161 = vmatprep.subr.mxu0 0.0
    %1162 = vmatpush1.msra.mxu0 0.0
    %1163 = vmatprep.subr.mxu0 0.0
    %1164 = vmatpush1.msra.mxu0 0.0
    %1165 = vmatprep.subr.mxu0 0.0
    %1166 = vmatpush1.msra.mxu0 0.0
    %1167 = vmatprep.subr.mxu0 0.0
    %1168 = vmatpush1.msra.mxu0 0.0
    %1169 = vmatprep.subr.mxu0 0.0
    %1170 = vmatpush1.msra.mxu0 0.0
    %1171 = vmatprep.subr.mxu0 0.0
    %1172 = vmatpush1.msra.mxu0 0.0
    %1173 = vmatprep.subr.mxu0 0.0
    %1174 = vmatpush1.msra.mxu0 0.0
    %1175 = vmatprep.subr.mxu0 0.0
    %1176 = vmatpush1.msra.mxu0 0.0
    %1177 = vmatprep.mubr.f32.mxu0 0.0
    %1178 = vmatmul.mubr.f32.gmra.mrb[0].mxu0 %v1111
    %v1179 = vpop.f32.mrb[0].mxu0
    %v1180 = vadd.f32 %v1107, %v1179
    %v1181 = vpop.f32.mrb[0].mxu0
    %1182 = vdwg.mxu0
    %v1183 = vadd.f32 %v1098, %v1180
    %v1184 = vxor.u32 %v1183, 2147483648
    %v1185 = vmul.f32 %v1184, 1.442695
    %v1186 = vpow.pop %v1185
    %v1187 = vadd.f32 %v1186, 1.0
    %v1188 = vrcp.pop %v1187
    %v1189 = vmul.f32 1.0, %v1188
    %1191 = vrot.lane.b32.xlu0 %v1180, 64
    %v1192 = vpop.permute.xlu0 %1191
    %v1194 = vmul.f32 %v1189, %v1192
    %1196 = vrot.lane.b32.xlu0 %v1194, 64
    %v1197 = vpop.permute.xlu0 %1196
    %v1199 = vadd.f32 %v1098, %v1197
    %v1200 = vtanh.pop %v1199
    %v1201 = vsub.f32 1.0, %v1189
    %1203 = vrot.lane.b32.xlu0 %v1200, 96
    %v1204 = vpop.permute.xlu0 %1203
    %v1206 = vmul.f32 %v1201, %v1204
    %v1207 = vlaneseq
    %v1208 = vshrl.u32 %v1207, 7
    %v1209 = vsub.s32 0, %v1208
    %v1210 = vrot.slane %v1109, %v1209
    %1211 = vrot.lane.b32.xlu0 %v1210, 32
    %v1212 = vpop.permute.xlu0 %1211
    %v1214 = vmul.f32 %v1189, %v1212
    %v1215 = vadd.f32 %v1206, %v1214
    %1217 = vrot.lane.b32.xlu0 %v1215, 96
    %v1218 = vpop.permute.xlu0 %1217
    %v1219 = vsel %vm66, %v1218, 0
    %1221 = vmatprep.subr.mxu0 0.0
    %1222 = vmatpush1.msra.mxu0 %v1102
    %1223 = vmatprep.subr.mxu0 0.0
    %1224 = vmatpush1.msra.mxu0 %v1103
    %1225 = vmatprep.subr.mxu0 0.0
    %1226 = vmatpush1.msra.mxu0 %v1104
    %1227 = vmatprep.subr.mxu0 0.0
    %1228 = vmatpush1.msra.mxu0 %v1105
    %1229 = vmatprep.subr.mxu0 0.0
    %1230 = vmatpush1.msra.mxu0 0.0
    %1231 = vmatprep.subr.mxu0 0.0
    %1232 = vmatpush1.msra.mxu0 0.0
    %1233 = vmatprep.subr.mxu0 0.0
    %1234 = vmatpush1.msra.mxu0 0.0
    %1235 = vmatprep.subr.mxu0 0.0
    %1236 = vmatpush1.msra.mxu0 0.0
    %1237 = vmatprep.subr.mxu0 0.0
    %1238 = vmatpush1.msra.mxu0 0.0
    %1239 = vmatprep.subr.mxu0 0.0
    %1240 = vmatpush1.msra.mxu0 0.0
    %1241 = vmatprep.subr.mxu0 0.0
    %1242 = vmatpush1.msra.mxu0 0.0
    %1243 = vmatprep.subr.mxu0 0.0
    %1244 = vmatpush1.msra.mxu0 0.0
    %1245 = vmatprep.subr.mxu0 0.0
    %1246 = vmatpush1.msra.mxu0 0.0
    %1247 = vmatprep.subr.mxu0 0.0
    %1248 = vmatpush1.msra.mxu0 0.0
    %1249 = vmatprep.subr.mxu0 0.0
    %1250 = vmatpush1.msra.mxu0 0.0
    %1251 = vmatprep.subr.mxu0 0.0
    %1252 = vmatpush1.msra.mxu0 0.0
    %1253 = vmatprep.subr.mxu0 0.0
    %1254 = vmatpush1.msra.mxu0 0.0
    %1255 = vmatprep.subr.mxu0 0.0
    %1256 = vmatpush1.msra.mxu0 0.0
    %1257 = vmatprep.subr.mxu0 0.0
    %1258 = vmatpush1.msra.mxu0 0.0
    %1259 = vmatprep.subr.mxu0 0.0
    %1260 = vmatpush1.msra.mxu0 0.0
    %1261 = vmatprep.subr.mxu0 0.0
    %1262 = vmatpush1.msra.mxu0 0.0
    %1263 = vmatprep.subr.mxu0 0.0
    %1264 = vmatpush1.msra.mxu0 0.0
    %1265 = vmatprep.subr.mxu0 0.0
    %1266 = vmatpush1.msra.mxu0 0.0
    %1267 = vmatprep.subr.mxu0 0.0
    %1268 = vmatpush1.msra.mxu0 0.0
    %1269 = vmatprep.subr.mxu0 0.0
    %1270 = vmatpush1.msra.mxu0 0.0
    %1271 = vmatprep.subr.mxu0 0.0
    %1272 = vmatpush1.msra.mxu0 0.0
    %1273 = vmatprep.subr.mxu0 0.0
    %1274 = vmatpush1.msra.mxu0 0.0
    %1275 = vmatprep.subr.mxu0 0.0
    %1276 = vmatpush1.msra.mxu0 0.0
    %1277 = vmatprep.subr.mxu0 0.0
    %1278 = vmatpush1.msra.mxu0 0.0
    %1279 = vmatprep.subr.mxu0 0.0
    %1280 = vmatpush1.msra.mxu0 0.0
    %1281 = vmatprep.subr.mxu0 0.0
    %1282 = vmatpush1.msra.mxu0 0.0
    %1283 = vmatprep.subr.mxu0 0.0
    %1284 = vmatpush1.msra.mxu0 0.0
    %1285 = vmatprep.mubr.f32.mxu0 0.0
    %1286 = vmatmul.mubr.f32.gmra.mrb[0].mxu0 %v1219
    %v1287 = vpop.f32.mrb[0].mxu0
    %v1288 = vadd.f32 %v1107, %v1287
    %v1289 = vpop.f32.mrb[0].mxu0
    %1290 = vdwg.mxu0
    %v1292 = vrot.slane %v1288, 7
    %v1294 = vadd.f32 %v1098, %v1292
    %v1295 = vxor.u32 %v1294, 2147483648
    %v1296 = vmul.f32 %v1295, 1.442695
    %v1297 = vpow.pop %v1296
    %v1298 = vadd.f32 %v1297, 1.0
    %v1299 = vrcp.pop %v1298
    %v1300 = vmul.f32 1.0, %v1299
    %1301 = vrot.lane.b32.xlu0 %v1292, 64
    %v1302 = vpop.permute.xlu0 %1301
    %v1304 = vmul.f32 %v1300, %v1302
    %1306 = vrot.lane.b32.xlu0 %v1304, 64
    %v1307 = vpop.permute.xlu0 %1306
    %v1309 = vadd.f32 %v1098, %v1307
    %v1310 = vtanh.pop %v1309
    %v1311 = vsub.f32 1.0, %v1300
    %1313 = vrot.lane.b32.xlu0 %v1310, 96
    %v1314 = vpop.permute.xlu0 %1313
    %v1316 = vmul.f32 %v1311, %v1314
    %v1317 = vrot.slane %v1215, 7
    %v1319 = vmul.f32 %v1300, %v1317
    %v1320 = vadd.f32 %v1316, %v1319
    %v1322 = vrot.slane %v1320, 1
    %1323 = vrot.lane.b32.xlu0 %v1322, 96
    %v1324 = vpop.permute.xlu0 %1323
    %v1325 = vsel %vm66, %v1324, 0
    %1327 = vmatprep.subr.mxu0 0.0
    %1328 = vmatpush1.msra.mxu0 %v1102
    %1329 = vmatprep.subr.mxu0 0.0
    %1330 = vmatpush1.msra.mxu0 %v1103
    %1331 = vmatprep.subr.mxu0 0.0
    %1332 = vmatpush1.msra.mxu0 %v1104
    %1333 = vmatprep.subr.mxu0 0.0
    %1334 = vmatpush1.msra.mxu0 %v1105
    %1335 = vmatprep.subr.mxu0 0.0
    %1336 = vmatpush1.msra.mxu0 0.0
    %1337 = vmatprep.subr.mxu0 0.0
    %1338 = vmatpush1.msra.mxu0 0.0
    %1339 = vmatprep.subr.mxu0 0.0
    %1340 = vmatpush1.msra.mxu0 0.0
    %1341 = vmatprep.subr.mxu0 0.0
    %1342 = vmatpush1.msra.mxu0 0.0
    %1343 = vmatprep.subr.mxu0 0.0
    %1344 = vmatpush1.msra.mxu0 0.0
    %1345 = vmatprep.subr.mxu0 0.0
    %1346 = vmatpush1.msra.mxu0 0.0
    %1347 = vmatprep.subr.mxu0 0.0
    %1348 = vmatpush1.msra.mxu0 0.0
    %1349 = vmatprep.subr.mxu0 0.0
    %1350 = vmatpush1.msra.mxu0 0.0
    %1351 = vmatprep.subr.mxu0 0.0
    %1352 = vmatpush1.msra.mxu0 0.0
    %1353 = vmatprep.subr.mxu0 0.0
    %1354 = vmatpush1.msra.mxu0 0.0
    %1355 = vmatprep.subr.mxu0 0.0
    %1356 = vmatpush1.msra.mxu0 0.0
    %1357 = vmatprep.subr.mxu0 0.0
    %1358 = vmatpush1.msra.mxu0 0.0
    %1359 = vmatprep.subr.mxu0 0.0
    %1360 = vmatpush1.msra.mxu0 0.0
    %1361 = vmatprep.subr.mxu0 0.0
    %1362 = vmatpush1.msra.mxu0 0.0
    %1363 = vmatprep.subr.mxu0 0.0
    %1364 = vmatpush1.msra.mxu0 0.0
    %1365 = vmatprep.subr.mxu0 0.0
    %1366 = vmatpush1.msra.mxu0 0.0
    %1367 = vmatprep.subr.mxu0 0.0
    %1368 = vmatpush1.msra.mxu0 0.0
    %1369 = vmatprep.subr.mxu0 0.0
    %1370 = vmatpush1.msra.mxu0 0.0
    %1371 = vmatprep.subr.mxu0 0.0
    %1372 = vmatpush1.msra.mxu0 0.0
    %1373 = vmatprep.subr.mxu0 0.0
    %1374 = vmatpush1.msra.mxu0 0.0
    %1375 = vmatprep.subr.mxu0 0.0
    %1376 = vmatpush1.msra.mxu0 0.0
    %1377 = vmatprep.subr.mxu0 0.0
    %1378 = vmatpush1.msra.mxu0 0.0
    %1379 = vmatprep.subr.mxu0 0.0
    %1380 = vmatpush1.msra.mxu0 0.0
    %1381 = vmatprep.subr.mxu0 0.0
    %1382 = vmatpush1.msra.mxu0 0.0
    %1383 = vmatprep.subr.mxu0 0.0
    %1384 = vmatpush1.msra.mxu0 0.0
    %1385 = vmatprep.subr.mxu0 0.0
    %1386 = vmatpush1.msra.mxu0 0.0
    %1387 = vmatprep.subr.mxu0 0.0
    %1388 = vmatpush1.msra.mxu0 0.0
    %1389 = vmatprep.subr.mxu0 0.0
    %1390 = vmatpush1.msra.mxu0 0.0
    %1391 = vmatprep.mubr.f32.mxu0 0.0
    %1392 = vmatmul.mubr.f32.gmra.mrb[0].mxu0 %v1325
    %v1393 = vpop.f32.mrb[0].mxu0
    %v1394 = vadd.f32 %v1107, %v1393
    %v1395 = vpop.f32.mrb[0].mxu0
    %1396 = vdwg.mxu0
    %v1398 = vrot.slane %v1394, 6
    %v1400 = vadd.f32 %v1098, %v1398
    %v1401 = vxor.u32 %v1400, 2147483648
    %v1402 = vmul.f32 %v1401, 1.442695
    %v1403 = vpow.pop %v1402
    %v1404 = vadd.f32 %v1403, 1.0
    %v1405 = vrcp.pop %v1404
    %v1406 = vmul.f32 1.0, %v1405
    %1407 = vrot.lane.b32.xlu0 %v1398, 64
    %v1408 = vpop.permute.xlu0 %1407
    %v1410 = vmul.f32 %v1406, %v1408
    %1412 = vrot.lane.b32.xlu0 %v1410, 64
    %v1413 = vpop.permute.xlu0 %1412
    %v1415 = vadd.f32 %v1098, %v1413
    %v1416 = vtanh.pop %v1415
    %v1417 = vsub.f32 1.0, %v1406
    %1419 = vrot.lane.b32.xlu0 %v1416, 96
    %v1420 = vpop.permute.xlu0 %1419
    %v1422 = vmul.f32 %v1417, %v1420
    %v1423 = vrot.slane %v1320, 7
    %v1425 = vmul.f32 %v1406, %v1423
    %v1426 = vadd.f32 %v1422, %v1425
    %v1428 = vrot.slane %v1426, 2
    %1429 = vrot.lane.b32.xlu0 %v1428, 96
    %v1430 = vpop.permute.xlu0 %1429
    %v1431 = vsel %vm66, %v1430, 0
    %1433 = vmatprep.subr.mxu0 0.0
    %1434 = vmatpush1.msra.mxu0 %v1102
    %1435 = vmatprep.subr.mxu0 0.0
    %1436 = vmatpush1.msra.mxu0 %v1103
    %1437 = vmatprep.subr.mxu0 0.0
    %1438 = vmatpush1.msra.mxu0 %v1104
    %1439 = vmatprep.subr.mxu0 0.0
    %1440 = vmatpush1.msra.mxu0 %v1105
    %1441 = vmatprep.subr.mxu0 0.0
    %1442 = vmatpush1.msra.mxu0 0.0
    %1443 = vmatprep.subr.mxu0 0.0
    %1444 = vmatpush1.msra.mxu0 0.0
    %1445 = vmatprep.subr.mxu0 0.0
    %1446 = vmatpush1.msra.mxu0 0.0
    %1447 = vmatprep.subr.mxu0 0.0
    %1448 = vmatpush1.msra.mxu0 0.0
    %1449 = vmatprep.subr.mxu0 0.0
    %1450 = vmatpush1.msra.mxu0 0.0
    %1451 = vmatprep.subr.mxu0 0.0
    %1452 = vmatpush1.msra.mxu0 0.0
    %1453 = vmatprep.subr.mxu0 0.0
    %1454 = vmatpush1.msra.mxu0 0.0
    %1455 = vmatprep.subr.mxu0 0.0
    %1456 = vmatpush1.msra.mxu0 0.0
    %1457 = vmatprep.subr.mxu0 0.0
    %1458 = vmatpush1.msra.mxu0 0.0
    %1459 = vmatprep.subr.mxu0 0.0
    %1460 = vmatpush1.msra.mxu0 0.0
    %1461 = vmatprep.subr.mxu0 0.0
    %1462 = vmatpush1.msra.mxu0 0.0
    %1463 = vmatprep.subr.mxu0 0.0
    %1464 = vmatpush1.msra.mxu0 0.0
    %1465 = vmatprep.subr.mxu0 0.0
    %1466 = vmatpush1.msra.mxu0 0.0
    %1467 = vmatprep.subr.mxu0 0.0
    %1468 = vmatpush1.msra.mxu0 0.0
    %1469 = vmatprep.subr.mxu0 0.0
    %1470 = vmatpush1.msra.mxu0 0.0
    %1471 = vmatprep.subr.mxu0 0.0
    %1472 = vmatpush1.msra.mxu0 0.0
    %1473 = vmatprep.subr.mxu0 0.0
    %1474 = vmatpush1.msra.mxu0 0.0
    %1475 = vmatprep.subr.mxu0 0.0
    %1476 = vmatpush1.msra.mxu0 0.0
    %1477 = vmatprep.subr.mxu0 0.0
    %1478 = vmatpush1.msra.mxu0 0.0
    %1479 = vmatprep.subr.mxu0 0.0
    %1480 = vmatpush1.msra.mxu0 0.0
    %1481 = vmatprep.subr.mxu0 0.0
    %1482 = vmatpush1.msra.mxu0 0.0
    %1483 = vmatprep.subr.mxu0 0.0
    %1484 = vmatpush1.msra.mxu0 0.0
    %1485 = vmatprep.subr.mxu0 0.0
    %1486 = vmatpush1.msra.mxu0 0.0
    %1487 = vmatprep.subr.mxu0 0.0
    %1488 = vmatpush1.msra.mxu0 0.0
    %1489 = vmatprep.subr.mxu0 0.0
    %1490 = vmatpush1.msra.mxu0 0.0
    %1491 = vmatprep.subr.mxu0 0.0
    %1492 = vmatpush1.msra.mxu0 0.0
    %1493 = vmatprep.subr.mxu0 0.0
    %1494 = vmatpush1.msra.mxu0 0.0
    %1495 = vmatprep.subr.mxu0 0.0
    %1496 = vmatpush1.msra.mxu0 0.0
    %1497 = vmatprep.mubr.f32.mxu0 0.0
    %1498 = vmatmul.mubr.f32.gmra.mrb[0].mxu0 %v1431
    %v1499 = vpop.f32.mrb[0].mxu0
    %v1500 = vadd.f32 %v1107, %v1499
    %v1501 = vpop.f32.mrb[0].mxu0
    %1502 = vdwg.mxu0
    %v1504 = vrot.slane %v1500, 5
    %v1506 = vadd.f32 %v1098, %v1504
    %v1507 = vxor.u32 %v1506, 2147483648
    %v1508 = vmul.f32 %v1507, 1.442695
    %v1509 = vpow.pop %v1508
    %v1510 = vadd.f32 %v1509, 1.0
    %v1511 = vrcp.pop %v1510
    %v1512 = vmul.f32 1.0, %v1511
    %1513 = vrot.lane.b32.xlu0 %v1504, 64
    %v1514 = vpop.permute.xlu0 %1513
    %v1516 = vmul.f32 %v1512, %v1514
    %1518 = vrot.lane.b32.xlu0 %v1516, 64
    %v1519 = vpop.permute.xlu0 %1518
    %v1521 = vadd.f32 %v1098, %v1519
    %v1522 = vtanh.pop %v1521
    %v1523 = vsub.f32 1.0, %v1512
    %1525 = vrot.lane.b32.xlu0 %v1522, 96
    %v1526 = vpop.permute.xlu0 %1525
    %v1528 = vmul.f32 %v1523, %v1526
    %v1529 = vrot.slane %v1426, 7
    %v1531 = vmul.f32 %v1512, %v1529
    %v1532 = vadd.f32 %v1528, %v1531
    %v1534 = vrot.slane %v1532, 3
    %1535 = vrot.lane.b32.xlu0 %v1534, 96
    %v1536 = vpop.permute.xlu0 %1535
    %v1537 = vsel %vm66, %v1536, 0
    %1539 = vmatprep.subr.mxu0 0.0
    %1540 = vmatpush1.msra.mxu0 %v1102
    %1541 = vmatprep.subr.mxu0 0.0
    %1542 = vmatpush1.msra.mxu0 %v1103
    %1543 = vmatprep.subr.mxu0 0.0
    %1544 = vmatpush1.msra.mxu0 %v1104
    %1545 = vmatprep.subr.mxu0 0.0
    %1546 = vmatpush1.msra.mxu0 %v1105
    %1547 = vmatprep.subr.mxu0 0.0
    %1548 = vmatpush1.msra.mxu0 0.0
    %1549 = vmatprep.subr.mxu0 0.0
    %1550 = vmatpush1.msra.mxu0 0.0
    %1551 = vmatprep.subr.mxu0 0.0
    %1552 = vmatpush1.msra.mxu0 0.0
    %1553 = vmatprep.subr.mxu0 0.0
    %1554 = vmatpush1.msra.mxu0 0.0
    %1555 = vmatprep.subr.mxu0 0.0
    %1556 = vmatpush1.msra.mxu0 0.0
    %1557 = vmatprep.subr.mxu0 0.0
    %1558 = vmatpush1.msra.mxu0 0.0
    %1559 = vmatprep.subr.mxu0 0.0
    %1560 = vmatpush1.msra.mxu0 0.0
    %1561 = vmatprep.subr.mxu0 0.0
    %1562 = vmatpush1.msra.mxu0 0.0
    %1563 = vmatprep.subr.mxu0 0.0
    %1564 = vmatpush1.msra.mxu0 0.0
    %1565 = vmatprep.subr.mxu0 0.0
    %1566 = vmatpush1.msra.mxu0 0.0
    %1567 = vmatprep.subr.mxu0 0.0
    %1568 = vmatpush1.msra.mxu0 0.0
    %1569 = vmatprep.subr.mxu0 0.0
    %1570 = vmatpush1.msra.mxu0 0.0
    %1571 = vmatprep.subr.mxu0 0.0
    %1572 = vmatpush1.msra.mxu0 0.0
    %1573 = vmatprep.subr.mxu0 0.0
    %1574 = vmatpush1.msra.mxu0 0.0
    %1575 = vmatprep.subr.mxu0 0.0
    %1576 = vmatpush1.msra.mxu0 0.0
    %1577 = vmatprep.subr.mxu0 0.0
    %1578 = vmatpush1.msra.mxu0 0.0
    %1579 = vmatprep.subr.mxu0 0.0
    %1580 = vmatpush1.msra.mxu0 0.0
    %1581 = vmatprep.subr.mxu0 0.0
    %1582 = vmatpush1.msra.mxu0 0.0
    %1583 = vmatprep.subr.mxu0 0.0
    %1584 = vmatpush1.msra.mxu0 0.0
    %1585 = vmatprep.subr.mxu0 0.0
    %1586 = vmatpush1.msra.mxu0 0.0
    %1587 = vmatprep.subr.mxu0 0.0
    %1588 = vmatpush1.msra.mxu0 0.0
    %1589 = vmatprep.subr.mxu0 0.0
    %1590 = vmatpush1.msra.mxu0 0.0
    %1591 = vmatprep.subr.mxu0 0.0
    %1592 = vmatpush1.msra.mxu0 0.0
    %1593 = vmatprep.subr.mxu0 0.0
    %1594 = vmatpush1.msra.mxu0 0.0
    %1595 = vmatprep.subr.mxu0 0.0
    %1596 = vmatpush1.msra.mxu0 0.0
    %1597 = vmatprep.subr.mxu0 0.0
    %1598 = vmatpush1.msra.mxu0 0.0
    %1599 = vmatprep.subr.mxu0 0.0
    %1600 = vmatpush1.msra.mxu0 0.0
    %1601 = vmatprep.subr.mxu0 0.0
    %1602 = vmatpush1.msra.mxu0 0.0
    %1603 = vmatprep.mubr.f32.mxu0 0.0
    %1604 = vmatmul.mubr.f32.gmra.mrb[0].mxu0 %v1537
    %v1605 = vpop.f32.mrb[0].mxu0
    %v1606 = vadd.f32 %v1107, %v1605
    %v1607 = vpop.f32.mrb[0].mxu0
    %1608 = vdwg.mxu0
    %v1610 = vrot.slane %v1606, 4
    %v1612 = vadd.f32 %v1098, %v1610
    %v1613 = vxor.u32 %v1612, 2147483648
    %v1614 = vmul.f32 %v1613, 1.442695
    %v1615 = vpow.pop %v1614
    %v1616 = vadd.f32 %v1615, 1.0
    %v1617 = vrcp.pop %v1616
    %v1618 = vmul.f32 1.0, %v1617
    %1619 = vrot.lane.b32.xlu0 %v1610, 64
    %v1620 = vpop.permute.xlu0 %1619
    %v1622 = vmul.f32 %v1618, %v1620
    %1624 = vrot.lane.b32.xlu0 %v1622, 64
    %v1625 = vpop.permute.xlu0 %1624
    %v1627 = vadd.f32 %v1098, %v1625
    %v1628 = vtanh.pop %v1627
    %v1629 = vsub.f32 1.0, %v1618
    %1631 = vrot.lane.b32.xlu0 %v1628, 96
    %v1632 = vpop.permute.xlu0 %1631
    %v1634 = vmul.f32 %v1629, %v1632
    %v1635 = vrot.slane %v1532, 7
    %v1637 = vmul.f32 %v1618, %v1635
    %v1638 = vadd.f32 %v1634, %v1637
    %v1640 = vrot.slane %v1638, 4
    %1641 = vrot.lane.b32.xlu0 %v1640, 96
    %v1642 = vpop.permute.xlu0 %1641
    %v1643 = vsel %vm66, %v1642, 0
    %1645 = vmatprep.subr.mxu0 0.0
    %1646 = vmatpush1.msra.mxu0 %v1102
    %1647 = vmatprep.subr.mxu0 0.0
    %1648 = vmatpush1.msra.mxu0 %v1103
    %1649 = vmatprep.subr.mxu0 0.0
    %1650 = vmatpush1.msra.mxu0 %v1104
    %1651 = vmatprep.subr.mxu0 0.0
    %1652 = vmatpush1.msra.mxu0 %v1105
    %1653 = vmatprep.subr.mxu0 0.0
    %1654 = vmatpush1.msra.mxu0 0.0
    %1655 = vmatprep.subr.mxu0 0.0
    %1656 = vmatpush1.msra.mxu0 0.0
    %1657 = vmatprep.subr.mxu0 0.0
    %1658 = vmatpush1.msra.mxu0 0.0
    %1659 = vmatprep.subr.mxu0 0.0
    %1660 = vmatpush1.msra.mxu0 0.0
    %1661 = vmatprep.subr.mxu0 0.0
    %1662 = vmatpush1.msra.mxu0 0.0
    %1663 = vmatprep.subr.mxu0 0.0
    %1664 = vmatpush1.msra.mxu0 0.0
    %1665 = vmatprep.subr.mxu0 0.0
    %1666 = vmatpush1.msra.mxu0 0.0
    %1667 = vmatprep.subr.mxu0 0.0
    %1668 = vmatpush1.msra.mxu0 0.0
    %1669 = vmatprep.subr.mxu0 0.0
    %1670 = vmatpush1.msra.mxu0 0.0
    %1671 = vmatprep.subr.mxu0 0.0
    %1672 = vmatpush1.msra.mxu0 0.0
    %1673 = vmatprep.subr.mxu0 0.0
    %1674 = vmatpush1.msra.mxu0 0.0
    %1675 = vmatprep.subr.mxu0 0.0
    %1676 = vmatpush1.msra.mxu0 0.0
    %1677 = vmatprep.subr.mxu0 0.0
    %1678 = vmatpush1.msra.mxu0 0.0
    %1679 = vmatprep.subr.mxu0 0.0
    %1680 = vmatpush1.msra.mxu0 0.0
    %1681 = vmatprep.subr.mxu0 0.0
    %1682 = vmatpush1.msra.mxu0 0.0
    %1683 = vmatprep.subr.mxu0 0.0
    %1684 = vmatpush1.msra.mxu0 0.0
    %1685 = vmatprep.subr.mxu0 0.0
    %1686 = vmatpush1.msra.mxu0 0.0
    %1687 = vmatprep.subr.mxu0 0.0
    %1688 = vmatpush1.msra.mxu0 0.0
    %1689 = vmatprep.subr.mxu0 0.0
    %1690 = vmatpush1.msra.mxu0 0.0
    %1691 = vmatprep.subr.mxu0 0.0
    %1692 = vmatpush1.msra.mxu0 0.0
    %1693 = vmatprep.subr.mxu0 0.0
    %1694 = vmatpush1.msra.mxu0 0.0
    %1695 = vmatprep.subr.mxu0 0.0
    %1696 = vmatpush1.msra.mxu0 0.0
    %1697 = vmatprep.subr.mxu0 0.0
    %1698 = vmatpush1.msra.mxu0 0.0
    %1699 = vmatprep.subr.mxu0 0.0
    %1700 = vmatpush1.msra.mxu0 0.0
    %1701 = vmatprep.subr.mxu0 0.0
    %1702 = vmatpush1.msra.mxu0 0.0
    %1703 = vmatprep.subr.mxu0 0.0
    %1704 = vmatpush1.msra.mxu0 0.0
    %1705 = vmatprep.subr.mxu0 0.0
    %1706 = vmatpush1.msra.mxu0 0.0
    %1707 = vmatprep.subr.mxu0 0.0
    %1708 = vmatpush1.msra.mxu0 0.0
    %1709 = vmatprep.mubr.f32.mxu0 0.0
    %1710 = vmatmul.mubr.f32.gmra.mrb[0].mxu0 %v1643
    %v1711 = vpop.f32.mrb[0].mxu0
    %v1712 = vadd.f32 %v1107, %v1711
    %v1713 = vpop.f32.mrb[0].mxu0
    %1714 = vdwg.mxu0
    %v1716 = vrot.slane %v1712, 3
    %v1718 = vadd.f32 %v1098, %v1716
    %v1719 = vxor.u32 %v1718, 2147483648
    %v1720 = vmul.f32 %v1719, 1.442695
    %v1721 = vpow.pop %v1720
    %v1722 = vadd.f32 %v1721, 1.0
    %v1723 = vrcp.pop %v1722
    %v1724 = vmul.f32 1.0, %v1723
    %1725 = vrot.lane.b32.xlu0 %v1716, 64
    %v1726 = vpop.permute.xlu0 %1725
    %v1728 = vmul.f32 %v1724, %v1726
    %1730 = vrot.lane.b32.xlu0 %v1728, 64
    %v1731 = vpop.permute.xlu0 %1730
    %v1733 = vadd.f32 %v1098, %v1731
    %v1734 = vtanh.pop %v1733
    %v1735 = vsub.f32 1.0, %v1724
    %1737 = vrot.lane.b32.xlu0 %v1734, 96
    %v1738 = vpop.permute.xlu0 %1737
    %v1740 = vmul.f32 %v1735, %v1738
    %v1741 = vrot.slane %v1638, 7
    %v1743 = vmul.f32 %v1724, %v1741
    %v1744 = vadd.f32 %v1740, %v1743
    %v1746 = vrot.slane %v1744, 5
    %1747 = vrot.lane.b32.xlu0 %v1746, 96
    %v1748 = vpop.permute.xlu0 %1747
    %v1749 = vsel %vm66, %v1748, 0
    %1751 = vmatprep.subr.mxu0 0.0
    %1752 = vmatpush1.msra.mxu0 %v1102
    %1753 = vmatprep.subr.mxu0 0.0
    %1754 = vmatpush1.msra.mxu0 %v1103
    %1755 = vmatprep.subr.mxu0 0.0
    %1756 = vmatpush1.msra.mxu0 %v1104
    %1757 = vmatprep.subr.mxu0 0.0
    %1758 = vmatpush1.msra.mxu0 %v1105
    %1759 = vmatprep.subr.mxu0 0.0
    %1760 = vmatpush1.msra.mxu0 0.0
    %1761 = vmatprep.subr.mxu0 0.0
    %1762 = vmatpush1.msra.mxu0 0.0
    %1763 = vmatprep.subr.mxu0 0.0
    %1764 = vmatpush1.msra.mxu0 0.0
    %1765 = vmatprep.subr.mxu0 0.0
    %1766 = vmatpush1.msra.mxu0 0.0
    %1767 = vmatprep.subr.mxu0 0.0
    %1768 = vmatpush1.msra.mxu0 0.0
    %1769 = vmatprep.subr.mxu0 0.0
    %1770 = vmatpush1.msra.mxu0 0.0
    %1771 = vmatprep.subr.mxu0 0.0
    %1772 = vmatpush1.msra.mxu0 0.0
    %1773 = vmatprep.subr.mxu0 0.0
    %1774 = vmatpush1.msra.mxu0 0.0
    %1775 = vmatprep.subr.mxu0 0.0
    %1776 = vmatpush1.msra.mxu0 0.0
    %1777 = vmatprep.subr.mxu0 0.0
    %1778 = vmatpush1.msra.mxu0 0.0
    %1779 = vmatprep.subr.mxu0 0.0
    %1780 = vmatpush1.msra.mxu0 0.0
    %1781 = vmatprep.subr.mxu0 0.0
    %1782 = vmatpush1.msra.mxu0 0.0
    %1783 = vmatprep.subr.mxu0 0.0
    %1784 = vmatpush1.msra.mxu0 0.0
    %1785 = vmatprep.subr.mxu0 0.0
    %1786 = vmatpush1.msra.mxu0 0.0
    %1787 = vmatprep.subr.mxu0 0.0
    %1788 = vmatpush1.msra.mxu0 0.0
    %1789 = vmatprep.subr.mxu0 0.0
    %1790 = vmatpush1.msra.mxu0 0.0
    %1791 = vmatprep.subr.mxu0 0.0
    %1792 = vmatpush1.msra.mxu0 0.0
    %1793 = vmatprep.subr.mxu0 0.0
    %1794 = vmatpush1.msra.mxu0 0.0
    %1795 = vmatprep.subr.mxu0 0.0
    %1796 = vmatpush1.msra.mxu0 0.0
    %1797 = vmatprep.subr.mxu0 0.0
    %1798 = vmatpush1.msra.mxu0 0.0
    %1799 = vmatprep.subr.mxu0 0.0
    %1800 = vmatpush1.msra.mxu0 0.0
    %1801 = vmatprep.subr.mxu0 0.0
    %1802 = vmatpush1.msra.mxu0 0.0
    %1803 = vmatprep.subr.mxu0 0.0
    %1804 = vmatpush1.msra.mxu0 0.0
    %1805 = vmatprep.subr.mxu0 0.0
    %1806 = vmatpush1.msra.mxu0 0.0
    %1807 = vmatprep.subr.mxu0 0.0
    %1808 = vmatpush1.msra.mxu0 0.0
    %1809 = vmatprep.subr.mxu0 0.0
    %1810 = vmatpush1.msra.mxu0 0.0
    %1811 = vmatprep.subr.mxu0 0.0
    %1812 = vmatpush1.msra.mxu0 0.0
    %1813 = vmatprep.subr.mxu0 0.0
    %1814 = vmatpush1.msra.mxu0 0.0
    %1815 = vmatprep.mubr.f32.mxu0 0.0
    %1816 = vmatmul.mubr.f32.gmra.mrb[0].mxu0 %v1749
    %v1817 = vpop.f32.mrb[0].mxu0
    %v1818 = vadd.f32 %v1107, %v1817
    %v1819 = vpop.f32.mrb[0].mxu0
    %1820 = vdwg.mxu0
    %v1822 = vrot.slane %v1818, 2
    %v1824 = vadd.f32 %v1098, %v1822
    %v1825 = vxor.u32 %v1824, 2147483648
    %v1826 = vmul.f32 %v1825, 1.442695
    %v1827 = vpow.pop %v1826
    %v1828 = vadd.f32 %v1827, 1.0
    %v1829 = vrcp.pop %v1828
    %v1830 = vmul.f32 1.0, %v1829
    %1831 = vrot.lane.b32.xlu0 %v1822, 64
    %v1832 = vpop.permute.xlu0 %1831
    %v1834 = vmul.f32 %v1830, %v1832
    %1836 = vrot.lane.b32.xlu0 %v1834, 64
    %v1837 = vpop.permute.xlu0 %1836
    %v1839 = vadd.f32 %v1098, %v1837
    %v1840 = vtanh.pop %v1839
    %v1841 = vsub.f32 1.0, %v1830
    %1843 = vrot.lane.b32.xlu0 %v1840, 96
    %v1844 = vpop.permute.xlu0 %1843
    %v1846 = vmul.f32 %v1841, %v1844
    %v1847 = vrot.slane %v1744, 7
    %v1849 = vmul.f32 %v1830, %v1847
    %v1850 = vadd.f32 %v1846, %v1849
    %v1852 = vrot.slane %v1850, 6
    %1853 = vrot.lane.b32.xlu0 %v1852, 96
    %v1854 = vpop.permute.xlu0 %1853
    %v1855 = vsel %vm66, %v1854, 0
    %1857 = vmatprep.subr.mxu0 0.0
    %1858 = vmatpush1.msra.mxu0 %v1102
    %1859 = vmatprep.subr.mxu0 0.0
    %1860 = vmatpush1.msra.mxu0 %v1103
    %1861 = vmatprep.subr.mxu0 0.0
    %1862 = vmatpush1.msra.mxu0 %v1104
    %1863 = vmatprep.subr.mxu0 0.0
    %1864 = vmatpush1.msra.mxu0 %v1105
    %1865 = vmatprep.subr.mxu0 0.0
    %1866 = vmatpush1.msra.mxu0 0.0
    %1867 = vmatprep.subr.mxu0 0.0
    %1868 = vmatpush1.msra.mxu0 0.0
    %1869 = vmatprep.subr.mxu0 0.0
    %1870 = vmatpush1.msra.mxu0 0.0
    %1871 = vmatprep.subr.mxu0 0.0
    %1872 = vmatpush1.msra.mxu0 0.0
    %1873 = vmatprep.subr.mxu0 0.0
    %1874 = vmatpush1.msra.mxu0 0.0
    %1875 = vmatprep.subr.mxu0 0.0
    %1876 = vmatpush1.msra.mxu0 0.0
    %1877 = vmatprep.subr.mxu0 0.0
    %1878 = vmatpush1.msra.mxu0 0.0
    %1879 = vmatprep.subr.mxu0 0.0
    %1880 = vmatpush1.msra.mxu0 0.0
    %1881 = vmatprep.subr.mxu0 0.0
    %1882 = vmatpush1.msra.mxu0 0.0
    %1883 = vmatprep.subr.mxu0 0.0
    %1884 = vmatpush1.msra.mxu0 0.0
    %1885 = vmatprep.subr.mxu0 0.0
    %1886 = vmatpush1.msra.mxu0 0.0
    %1887 = vmatprep.subr.mxu0 0.0
    %1888 = vmatpush1.msra.mxu0 0.0
    %1889 = vmatprep.subr.mxu0 0.0
    %1890 = vmatpush1.msra.mxu0 0.0
    %1891 = vmatprep.subr.mxu0 0.0
    %1892 = vmatpush1.msra.mxu0 0.0
    %1893 = vmatprep.subr.mxu0 0.0
    %1894 = vmatpush1.msra.mxu0 0.0
    %1895 = vmatprep.subr.mxu0 0.0
    %1896 = vmatpush1.msra.mxu0 0.0
    %1897 = vmatprep.subr.mxu0 0.0
    %1898 = vmatpush1.msra.mxu0 0.0
    %1899 = vmatprep.subr.mxu0 0.0
    %1900 = vmatpush1.msra.mxu0 0.0
    %1901 = vmatprep.subr.mxu0 0.0
    %1902 = vmatpush1.msra.mxu0 0.0
    %1903 = vmatprep.subr.mxu0 0.0
    %1904 = vmatpush1.msra.mxu0 0.0
    %1905 = vmatprep.subr.mxu0 0.0
    %1906 = vmatpush1.msra.mxu0 0.0
    %1907 = vmatprep.subr.mxu0 0.0
    %1908 = vmatpush1.msra.mxu0 0.0
    %1909 = vmatprep.subr.mxu0 0.0
    %1910 = vmatpush1.msra.mxu0 0.0
    %1911 = vmatprep.subr.mxu0 0.0
    %1912 = vmatpush1.msra.mxu0 0.0
    %1913 = vmatprep.subr.mxu0 0.0
    %1914 = vmatpush1.msra.mxu0 0.0
    %1915 = vmatprep.subr.mxu0 0.0
    %1916 = vmatpush1.msra.mxu0 0.0
    %1917 = vmatprep.subr.mxu0 0.0
    %1918 = vmatpush1.msra.mxu0 0.0
    %1919 = vmatprep.subr.mxu0 0.0
    %1920 = vmatpush1.msra.mxu0 0.0
    %1921 = vmatprep.mubr.f32.mxu0 0.0
    %1922 = vmatmul.mubr.f32.gmra.mrb[0].mxu0 %v1855
    %v1923 = vpop.f32.mrb[0].mxu0
    %v1924 = vadd.f32 %v1107, %v1923
    %v1925 = vpop.f32.mrb[0].mxu0
    %1926 = vdwg.mxu0
    %v1928 = vrot.slane %v1924, 1
    %v1930 = vadd.f32 %v1098, %v1928
    %v1931 = vxor.u32 %v1930, 2147483648
    %v1932 = vmul.f32 %v1931, 1.442695
    %v1933 = vpow.pop %v1932
    %v1934 = vadd.f32 %v1933, 1.0
    %v1935 = vrcp.pop %v1934
    %v1936 = vmul.f32 1.0, %v1935
    %1937 = vrot.lane.b32.xlu0 %v1928, 64
    %v1938 = vpop.permute.xlu0 %1937
    %v1940 = vmul.f32 %v1936, %v1938
    %1942 = vrot.lane.b32.xlu0 %v1940, 64
    %v1943 = vpop.permute.xlu0 %1942
    %v1945 = vadd.f32 %v1098, %v1943
    %v1946 = vtanh.pop %v1945
    %v1947 = vsub.f32 1.0, %v1936
    %1949 = vrot.lane.b32.xlu0 %v1946, 96
    %v1950 = vpop.permute.xlu0 %1949
    %v1952 = vmul.f32 %v1947, %v1950
    %v1953 = vrot.slane %v1850, 7
    %v1955 = vmul.f32 %v1936, %v1953
    %v1956 = vadd.f32 %v1952, %v1955
    %1958 = vrot.lane.b32.xlu0 %v1956, 96
    %v1959 = vpop.permute.xlu0 %1958
    %s1961 = scalar_lea.vmem %s7, 1
    %1962 = vst.msk [vmem:[%s1961 - $0x7] sm:$0x80] %vm997, %v1959
    %v1963 = vsel %vm999, %v1215, %v1320
    %v1964 = vsel %vm1001, %v1963, %v1426
    %v1965 = vsel %vm1003, %v1964, %v1532
    %v1966 = vsel %vm1005, %v1965, %v1638
    %v1967 = vsel %vm1007, %v1966, %v1744
    %v1968 = vsel %vm1009, %v1967, %v1850
    %v1969 = vsel %vm1011, %v1968, %v1956
    %1971 = vrot.lane.b32.xlu0 %v1969, 96
    %v1972 = vpop.permute.xlu0 %1971
    %1974 = vst.msk [vmem:[#allocation7] sm:$0xff] %vm66, %v1972
    // Predicated region
    $region34: #{generator_forward.1} parent=1 // pred_check
      _
    $region35: #{generator_forward.1} parent=1 // pred_check_branch
      %1976 = sbr.rel (0) target = $region37
    $region36: #{generator_forward.1} parent=1 // pred_region
      %s1978 = ssub.s32 128, 128
      %1979 = vsyncadd [#allocation4], %s1978
      %s1981 = sshll.u32 [#allocation7], 4
      %s1982 = int_to_ptr.vmem [resolvable:$true] %s1981
      %1984 = dma.vmem_to_hbm [thread:$0]  %s1982, 128, %s6, [#allocation4]
    $region37: #{generator_forward.1} parent=1 // pred_fallthru
      _
    // Predicated region
    $region38: #{generator_forward.1} parent=1 // pred_check
      _
    $region39: #{generator_forward.1} parent=1 // pred_check_branch
      %1986 = sbr.rel (0) target = $region41
    $region40: #{generator_forward.1} parent=1 // pred_region
      _
    $region41: #{generator_forward.1} parent=1 // pred_fallthru
      _
    // Predicated region
    $region42: #{generator_forward.1} parent=1 // pred_check
      _
    $region43: #{generator_forward.1} parent=1 // pred_check_branch
      %1988 = sbr.rel (0) target = $region45
    $region44: #{generator_forward.1} parent=1 // pred_region
      %1989 = dma.done [#allocation4], 128
    $region45: #{generator_forward.1} parent=1 // pred_fallthru
      _
    // Predicated region
    $region46: #{generator_forward.1} parent=1 // pred_check
      _
    $region47: #{generator_forward.1} parent=1 // pred_check_branch
      %1991 = sbr.rel (0) target = $region49
    $region48: #{generator_forward.1} parent=1 // pred_region
      _
    $region49: #{generator_forward.1} parent=1 // pred_fallthru
      _
    %1992 = vsyncpa [#allocation3], 1
    %1993 = vsyncpa [#allocation6], 1
    %1994 = vsyncpa [#allocation4], 1

</llo_original>
